<compile_context>
chip_gen: v5e
topology: v5e:2x2
jax: 0.10.0
libtpu: 0.0.40
codegen_flags: <defaults>
</compile_context>

<pallas_src>
import numpy as np
import jax
import jax.numpy as jnp
from jax.experimental import pallas as pl
from jax.experimental.pallas import tpu as pltpu


_INV_SQRT2 = 0.7071067811865476
# Abramowitz & Stegun 7.1.26 erf coefficients (|err| <= 1.5e-7).
_A1, _A2, _A3 = 0.254829592, -0.284496736, 1.421413741
_A4, _A5, _P = -1.453152027, 1.061405429, 0.3275911


def _gelu_exact(x):
    """torch.nn.GELU default (erf-based), VPU/EUP-friendly.

    Phi(x) = where(x>=0, 1 - E/2, E/2), E = poly(t)*exp(-z^2),
    z = |x|/sqrt(2), t = 1/(1 + p*z).  Odd symmetry removes the sign
    multiply; the divide goes to the EUP via pl.reciprocal.
    """
    z = jnp.abs(x) * _INV_SQRT2
    t = pl.reciprocal(1.0 + _P * z, approx=True)
    poly = ((((_A5 * t + _A4) * t + _A3) * t + _A2) * t + _A1) * t
    half_e = 0.5 * poly * jnp.exp(-z * z)
    phi = jnp.where(x >= 0.0, 1.0 - half_e, half_e)
    return x * phi


# ----------------------------------------------------------------------------
# Fused kernel: conv_1 (+ folded BN) -> GELU -> conv_2 -> sigmoid, NCHW-native
# ----------------------------------------------------------------------------
def interaction_kernel(x_ref, w1_ref, b1_ref, w2_ref, b2_ref, o_ref):
    # x_ref : (1, C, TS)  channels on sublanes, spatial tile on lanes
    # w1_ref: (C, C)      conv_1 weight with BN scale folded in  (Cout, Cin)
    # b1_ref: (C, 1)      conv_1 bias with BN shift folded in
    # w2_ref: (C, C)      conv_2 weight (Cout, Cin)
    # b2_ref: (C, 1)      conv_2 bias
    # o_ref : (1, C, TS)
    x = x_ref[0]
    h = jnp.dot(w1_ref[...], x, preferred_element_type=jnp.float32) + b1_ref[...]
    h = _gelu_exact(h)
    y = jnp.dot(w2_ref[...], h, preferred_element_type=jnp.float32) + b2_ref[...]
    # sigmoid(y) = 0.5*tanh(y/2) + 0.5  (EUP tanh, no VPU divide / exp)
    o_ref[0] = (0.5 * jnp.tanh(0.5 * y) + 0.5).astype(o_ref.dtype)


def interaction_forward(params, x):
    # x: (B, C, H, W) — PyTorch NCHW layout, kept end-to-end.
    B, C, H, W = x.shape
    HW = H * W

    # Fold eval-mode BatchNorm (eps=1e-8, matching the module) into conv_1.
    inv = params["gamma"] * jax.lax.rsqrt(params["var"] + 1e-8)
    w1f = params["w1"] * inv[:, None]                              # (Cout, Cin)
    b1f = ((params["b1"] - params["mean"]) * inv + params["beta"])[:, None]
    w2f = params["w2"]                                             # (Cout, Cin)
    b2f = params["b2"][:, None]

    # Free contiguous reshape; no transposes, no padding.
    xf = x.reshape(B, C, HW)

    # Spatial tile: full extent when small (legal even if not 128-aligned,
    # since it equals the array dim); otherwise a 2048-lane 128-aligned tile
    # with the trailing partial block masked by Pallas.
    TS = HW if HW <= 2048 else 2048
    grid = (B, pl.cdiv(HW, TS))

    out = pl.pallas_call(
        interaction_kernel,
        out_shape=jax.ShapeDtypeStruct((B, C, HW), jnp.float32),
        grid=grid,
        in_specs=[
            pl.BlockSpec((1, C, TS), lambda b, s: (b, 0, s)),
            pl.BlockSpec((C, C), lambda b, s: (0, 0)),
            pl.BlockSpec((C, 1), lambda b, s: (0, 0)),
            pl.BlockSpec((C, C), lambda b, s: (0, 0)),
            pl.BlockSpec((C, 1), lambda b, s: (0, 0)),
        ],
        out_specs=pl.BlockSpec((1, C, TS), lambda b, s: (b, 0, s)),
        compiler_params=pltpu.CompilerParams(
            dimension_semantics=("parallel", "parallel")),
    )(xf, w1f, b1f, w2f, b2f)

    return out.reshape(B, C, H, W)


# ----------------------------------------------------------------------------
# Deterministic parameters (shapes from Interaction.__init__(channel)).
# ----------------------------------------------------------------------------
def make_params(key, channel):
    ks = jax.random.split(key, 8)
    return {
        "w1": 0.05 * jax.random.normal(ks[0], (channel, channel), jnp.float32),
        "b1": 0.05 * jax.random.normal(ks[1], (channel,), jnp.float32),
        "gamma": 1.0 + 0.1 * jax.random.normal(ks[2], (channel,), jnp.float32),
        "beta": 0.1 * jax.random.normal(ks[3], (channel,), jnp.float32),
        "mean": 0.1 * jax.random.normal(ks[4], (channel,), jnp.float32),
        "var": jax.random.uniform(ks[5], (channel,), jnp.float32, 0.5, 1.5),
        "w2": 0.05 * jax.random.normal(ks[6], (channel, channel), jnp.float32),
        "b2": 0.05 * jax.random.normal(ks[7], (channel,), jnp.float32),
    }


# ----------------------------------------------------------------------------
# Pure-XLA high-precision reference for numerical verification.
# ----------------------------------------------------------------------------
def ref_interaction(params, x):
    hp = jax.lax.Precision.HIGHEST
    y = jnp.einsum("bchw,dc->bdhw", x, params["w1"], precision=hp)
    y = y + params["b1"][None, :, None, None]
    inv = (params["gamma"] / jnp.sqrt(params["var"] + 1e-8))[None, :, None, None]
    y = (y - params["mean"][None, :, None, None]) * inv \
        + params["beta"][None, :, None, None]
    y = 0.5 * y * (1.0 + jax.scipy.special.erf(y * _INV_SQRT2))   # exact GELU
    y = jnp.einsum("bchw,dc->bdhw", y, params["w2"], precision=hp)
    y = y + params["b2"][None, :, None, None]
    return jax.nn.sigmoid(y)


if __name__ == "__main__":
    key = jax.random.PRNGKey(0)
    kx, kp = jax.random.split(key)
    B, C, H, W = 2, 128, 16, 16     # grid = (2, 1): one batch per TC on v7x
    x = jax.random.normal(kx, (B, C, H, W), jnp.float32)
    params = make_params(kp, C)

    out = jax.jit(interaction_forward)(params, x)
    out = jax.block_until_ready(out)
    assert out.shape == (B, C, H, W), out.shape

    ref = jax.block_until_ready(ref_interaction(params, x))
    np.testing.assert_allclose(np.asarray(out), np.asarray(ref),
                               rtol=2e-3, atol=2e-3)
    print("KERNEL_OK")
</pallas_src>

<mosaic_0001>
module attributes {stable_mosaic.version = 11 : i64} {
  func.func @interaction_kernel(%arg0: i32, %arg1: i32, %arg2: memref<1x128x256xf32, #tpu.memory_space<vmem>>, %arg3: memref<128x128xf32, #tpu.memory_space<vmem>>, %arg4: memref<128x1xf32, #tpu.memory_space<vmem>>, %arg5: memref<128x128xf32, #tpu.memory_space<vmem>>, %arg6: memref<128x1xf32, #tpu.memory_space<vmem>>, %arg7: memref<1x128x256xf32, #tpu.memory_space<vmem>>) attributes {dimension_semantics = [#tpu.dimension_semantics<parallel>, #tpu.dimension_semantics<parallel>], iteration_bounds = array<i64: 2, 1>, scalar_prefetch = 0 : i64, scratch_operands = 0 : i64, tpu.core_type = #tpu.core_type<tc>, window_params = [{transform_indices = @transform_0, window_bounds = array<i64: 1, 128, 256>}, {pipeline_mode = #tpu.pipeline_mode<synchronous>, transform_indices = @transform_1, window_bounds = array<i64: 128, 128>}, {pipeline_mode = #tpu.pipeline_mode<synchronous>, transform_indices = @transform_2, window_bounds = array<i64: 128, 1>}, {pipeline_mode = #tpu.pipeline_mode<synchronous>, transform_indices = @transform_3, window_bounds = array<i64: 128, 128>}, {pipeline_mode = #tpu.pipeline_mode<synchronous>, transform_indices = @transform_4, window_bounds = array<i64: 128, 1>}, {transform_indices = @transform_5, window_bounds = array<i64: 1, 128, 256>}]} {
    %c0 = arith.constant 0 : index
    %c0_0 = arith.constant 0 : index
    %c0_1 = arith.constant 0 : index
    %0 = vector.load %arg2[%c0, %c0_0, %c0_1] : memref<1x128x256xf32, #tpu.memory_space<vmem>>, vector<1x128x256xf32>
    %1 = vector.shape_cast %0 : vector<1x128x256xf32> to vector<128x256xf32>
    %c0_2 = arith.constant 0 : index
    %c0_3 = arith.constant 0 : index
    %2 = vector.load %arg3[%c0_2, %c0_3] : memref<128x128xf32, #tpu.memory_space<vmem>>, vector<128x128xf32>
    %cst = arith.constant dense<0.000000e+00> : vector<128x256xf32>
    %3 = tpu.matmul %2, %1, %cst {dimension_numbers = #tpu.dot_dimension_numbers<[1], [0], [0], [1], [0, 0, 1, 1], [], []>} : vector<128x128xf32>, vector<128x256xf32>, vector<128x256xf32> -> vector<128x256xf32>
    %c0_4 = arith.constant 0 : index
    %c0_5 = arith.constant 0 : index
    %4 = vector.load %arg4[%c0_4, %c0_5] : memref<128x1xf32, #tpu.memory_space<vmem>>, vector<128x1xf32>
    %5 = vector.broadcast %4 : vector<128x1xf32> to vector<128x256xf32>
    %6 = arith.addf %3, %5 : vector<128x256xf32>
    %7 = math.absf %6 : vector<128x256xf32>
    %cst_6 = arith.constant 0.707106769 : f32
    %8 = vector.broadcast %cst_6 : f32 to vector<128x256xf32>
    %9 = arith.mulf %7, %8 : vector<128x256xf32>
    %cst_7 = arith.constant 0.327591091 : f32
    %10 = vector.broadcast %cst_7 : f32 to vector<128x256xf32>
    %11 = arith.mulf %10, %9 : vector<128x256xf32>
    %cst_8 = arith.constant 1.000000e+00 : f32
    %12 = vector.broadcast %cst_8 : f32 to vector<128x256xf32>
    %13 = arith.addf %12, %11 : vector<128x256xf32>
    %14 = tpu.reciprocal %13 {approx = true} : vector<128x256xf32> -> vector<128x256xf32>
    %cst_9 = arith.constant 1.06140542 : f32
    %15 = vector.broadcast %cst_9 : f32 to vector<128x256xf32>
    %16 = arith.mulf %15, %14 : vector<128x256xf32>
    %cst_10 = arith.constant -1.45315206 : f32
    %17 = vector.broadcast %cst_10 : f32 to vector<128x256xf32>
    %18 = arith.addf %16, %17 : vector<128x256xf32>
    %19 = arith.mulf %18, %14 : vector<128x256xf32>
    %cst_11 = arith.constant 1.42141378 : f32
    %20 = vector.broadcast %cst_11 : f32 to vector<128x256xf32>
    %21 = arith.addf %19, %20 : vector<128x256xf32>
    %22 = arith.mulf %21, %14 : vector<128x256xf32>
    %cst_12 = arith.constant -0.284496725 : f32
    %23 = vector.broadcast %cst_12 : f32 to vector<128x256xf32>
    %24 = arith.addf %22, %23 : vector<128x256xf32>
    %25 = arith.mulf %24, %14 : vector<128x256xf32>
    %cst_13 = arith.constant 0.254829586 : f32
    %26 = vector.broadcast %cst_13 : f32 to vector<128x256xf32>
    %27 = arith.addf %25, %26 : vector<128x256xf32>
    %28 = arith.mulf %27, %14 : vector<128x256xf32>
    %cst_14 = arith.constant 5.000000e-01 : f32
    %29 = vector.broadcast %cst_14 : f32 to vector<128x256xf32>
    %30 = arith.mulf %29, %28 : vector<128x256xf32>
    %cst_15 = arith.constant 0.000000e+00 : f32
    %31 = vector.broadcast %cst_15 : f32 to vector<128x256xf32>
    %32 = arith.subf %31, %9 : vector<128x256xf32>
    %33 = arith.mulf %32, %9 : vector<128x256xf32>
    %34 = math.exp %33 : vector<128x256xf32>
    %35 = arith.mulf %30, %34 : vector<128x256xf32>
    %cst_16 = arith.constant 0.000000e+00 : f32
    %36 = vector.broadcast %cst_16 : f32 to vector<128x256xf32>
    %37 = arith.cmpf oge, %6, %36 : vector<128x256xf32>
    %cst_17 = arith.constant 1.000000e+00 : f32
    %38 = vector.broadcast %cst_17 : f32 to vector<128x256xf32>
    %39 = arith.subf %38, %35 : vector<128x256xf32>
    %40 = arith.select %37, %39, %35 : vector<128x256xi1>, vector<128x256xf32>
    %41 = arith.mulf %6, %40 : vector<128x256xf32>
    %c0_18 = arith.constant 0 : index
    %c0_19 = arith.constant 0 : index
    %42 = vector.load %arg5[%c0_18, %c0_19] : memref<128x128xf32, #tpu.memory_space<vmem>>, vector<128x128xf32>
    %cst_20 = arith.constant dense<0.000000e+00> : vector<128x256xf32>
    %43 = tpu.matmul %42, %41, %cst_20 {dimension_numbers = #tpu.dot_dimension_numbers<[1], [0], [0], [1], [0, 0, 1, 1], [], []>} : vector<128x128xf32>, vector<128x256xf32>, vector<128x256xf32> -> vector<128x256xf32>
    %c0_21 = arith.constant 0 : index
    %c0_22 = arith.constant 0 : index
    %44 = vector.load %arg6[%c0_21, %c0_22] : memref<128x1xf32, #tpu.memory_space<vmem>>, vector<128x1xf32>
    %45 = vector.broadcast %44 : vector<128x1xf32> to vector<128x256xf32>
    %46 = arith.addf %43, %45 : vector<128x256xf32>
    %cst_23 = arith.constant 5.000000e-01 : f32
    %47 = vector.broadcast %cst_23 : f32 to vector<128x256xf32>
    %48 = arith.mulf %47, %46 : vector<128x256xf32>
    %49 = math.tanh %48 : vector<128x256xf32>
    %cst_24 = arith.constant 5.000000e-01 : f32
    %50 = vector.broadcast %cst_24 : f32 to vector<128x256xf32>
    %51 = arith.mulf %50, %49 : vector<128x256xf32>
    %cst_25 = arith.constant 5.000000e-01 : f32
    %52 = vector.broadcast %cst_25 : f32 to vector<128x256xf32>
    %53 = arith.addf %51, %52 : vector<128x256xf32>
    %c0_26 = arith.constant 0 : index
    %c0_27 = arith.constant 0 : index
    %c0_28 = arith.constant 0 : index
    %54 = vector.load %arg7[%c0_26, %c0_27, %c0_28] : memref<1x128x256xf32, #tpu.memory_space<vmem>>, vector<1x128x256xf32>
    %55 = vector.shape_cast %54 : vector<1x128x256xf32> to vector<128x256xf32>
    %56 = vector.shape_cast %53 : vector<128x256xf32> to vector<1x128x256xf32>
    tpu.vector_store %arg7[%c0_26, %c0_27, %c0_28], %56 {strides = array<i32>} : memref<1x128x256xf32, #tpu.memory_space<vmem>>, vector<1x128x256xf32>,
    return
  }
  func.func @transform_0(%arg0: i32, %arg1: i32) -> (i32, i32, i32) {
    %c0_i32 = arith.constant 0 : i32
    %c0_i32_0 = arith.constant 0 : i32
    return %arg0, %c0_i32, %arg1 : i32, i32, i32
  }
  func.func @transform_1(%arg0: i32, %arg1: i32) -> (i32, i32) {
    %c0_i32 = arith.constant 0 : i32
    %c0_i32_0 = arith.constant 0 : i32
    %c0_i32_1 = arith.constant 0 : i32
    return %c0_i32, %c0_i32_0 : i32, i32
  }
  func.func @transform_2(%arg0: i32, %arg1: i32) -> (i32, i32) {
    %c0_i32 = arith.constant 0 : i32
    %c0_i32_0 = arith.constant 0 : i32
    %c0_i32_1 = arith.constant 0 : i32
    return %c0_i32, %c0_i32_0 : i32, i32
  }
  func.func @transform_3(%arg0: i32, %arg1: i32) -> (i32, i32) {
    %c0_i32 = arith.constant 0 : i32
    %c0_i32_0 = arith.constant 0 : i32
    %c0_i32_1 = arith.constant 0 : i32
    return %c0_i32, %c0_i32_0 : i32, i32
  }
  func.func @transform_4(%arg0: i32, %arg1: i32) -> (i32, i32) {
    %c0_i32 = arith.constant 0 : i32
    %c0_i32_0 = arith.constant 0 : i32
    %c0_i32_1 = arith.constant 0 : i32
    return %c0_i32, %c0_i32_0 : i32, i32
  }
  func.func @transform_5(%arg0: i32, %arg1: i32) -> (i32, i32, i32) {
    %c0_i32 = arith.constant 0 : i32
    %c0_i32_0 = arith.constant 0 : i32
    return %arg0, %c0_i32, %arg1 : i32, i32, i32
  }
}

</mosaic_0001>

<llo_original>
// kernel: interaction_forward.1
$region0: #{interaction_forward.1}
  #allocation0 [shape = 'u32[]', space=smem, size = 0x4, offset = 0x4, fixed_abs, tag = 'smem constant byte address 0x4 - core index']
  #allocation1 [shape = 'u32[72,128]{1,0:T(1,128)}', space=vmem, size = 0x9000, scoped, tag = 'internal scratch']
  %s0 = inlined_call_operand.vmem [shape: f32[2,128,256], index: 0, kind: input, shape index: {}]
  %s1 = inlined_call_operand.vmem [shape: f32[128,128], index: 1, kind: input, shape index: {}]
  %s2 = inlined_call_operand.vmem [shape: f32[128,1], index: 2, kind: input, shape index: {}]
  %s3 = inlined_call_operand.vmem [shape: f32[128,128], index: 3, kind: input, shape index: {}]
  %s4 = inlined_call_operand.vmem [shape: f32[128,1], index: 4, kind: input, shape index: {}]
  %s5 = inlined_call_operand.vmem [shape: f32[2,128,256], index: 5, kind: output, shape index: {}]
  %s6 = sld [smem:[#allocation0]]
  $region53: #{interaction_forward.1} parent=0
    _
  %s8 = ssub.s32 1, %s6
  %s9 = scalar_select 0, %s8, %s6
  loop: start=0, step=1, limit=4
  $region2: #{interaction_forward.1} parent=0 // loop_pre_header
    _
  $region3: #{interaction_forward.1} parent=0 // loop_header
    %s11 = sphi 0, %s15
    %p12 = scmp.ge.s32.totalorder %s11, 4
    %s18 = sphi 0, %s30
    %s19 = sphi 0, %s26
    %s20 = sphi 0, %s18
    %s21 = sphi 0, %s19
    %s22 = sphi 0, %s20
    %s23 = sphi 0, %s21
    %s35 = sphi 0, %s37
    %s38 = sphi 0, %s35
    %s39 = sphi 0, %s38
    %s55 = sphi 0, %s39
    %s59 = sphi 0, %s59
    %s61 = sphi 0, %s59
    %s62 = sphi 0, %s61
    %s76 = sphi 0, %s62
    %s80 = sphi 0, %s80
    %s82 = sphi 0, %s80
    %s83 = sphi 0, %s82
    %s97 = sphi 0, %s83
    %s101 = sphi 0, %s101
    %s103 = sphi 0, %s101
    %s104 = sphi 0, %s103
    %s118 = sphi 0, %s104
    %s122 = sphi 0, %s122
    %s124 = sphi 0, %s122
    %s125 = sphi 0, %s124
    %s139 = sphi 0, %s125
    %s147 = sphi 0, %s149
    %s150 = sphi 0, %s147
    %s151 = sphi 0, %s150
    %s167 = sphi 0, %s151
  $region4: #{interaction_forward.1} parent=0 // loop_header_branch
    %14 = sbr.rel (%p12) target = $region8
  $region5: #{interaction_forward.1} parent=0 // loop_body
    %s16 = ssub.s32 %s11, 1
    %s17 = ssub.s32 %s11, 2
    %s24 = sadd.s32 1, %s19
    %p25 = scmp.ge.s32.totalorder %s24, 1
    %s26 = scalar_select %p25, 0, %s24
    %s27 = sadd.s32 1, %s18
    %s28 = scalar_select %p25, %s27, %s18
    %p29 = scmp.ge.s32.totalorder %s28, 2
    %s30 = scalar_select %p29, 0, %s28
    %s31 = ssub.s32 %s18, %s30
    %s32 = ssub.s32 %s19, %s26
    %s33 = sor.u32 %s31, %s32
    %p34 = scmp.eq.s32.totalorder %s33, 0
    %s36 = sadd.s32 %s35, 1
    %s37 = scalar_select %p34, %s35, %s36
    %p40 = pneg %p34
    %p41 = scmp.eq.s32.totalorder %s11, 1
    %p42 = por %p40, %p41
    %p43 = scmp.ne.s32.totalorder %s35, %s38
    %p44 = scmp.eq.s32.totalorder %s11, 0
    %p45 = por %p43, %p44
    %p46 = scmp.ne.s32.totalorder %s35, %s38
    %p47 = scmp.eq.s32.totalorder %s16, 1
    %p48 = por %p46, %p47
    %p49 = scmp.ne.s32.totalorder %s38, %s39
    %p50 = scmp.eq.s32.totalorder %s16, 0
    %p51 = por %p49, %p50
    %p52 = scmp.ne.s32.totalorder %s38, %s39
    %p53 = scmp.eq.s32.totalorder %s17, 1
    %p54 = por %p52, %p53
    %p56 = scmp.ne.s32.totalorder %s39, %s55
    %p57 = scmp.eq.s32.totalorder %s17, 0
    %p58 = por %p56, %p57
    %s60 = sadd.s32 %s59, 1
    %p63 = scmp.eq.s32.totalorder %s11, 1
    %p64 = scmp.ne.s32.totalorder %s59, %s61
    %p65 = scmp.eq.s32.totalorder %s11, 0
    %p66 = por %p64, %p65
    %p67 = scmp.ne.s32.totalorder %s59, %s61
    %p68 = scmp.eq.s32.totalorder %s16, 1
    %p69 = por %p67, %p68
    %p70 = scmp.ne.s32.totalorder %s61, %s62
    %p71 = scmp.eq.s32.totalorder %s16, 0
    %p72 = por %p70, %p71
    %p73 = scmp.ne.s32.totalorder %s61, %s62
    %p74 = scmp.eq.s32.totalorder %s17, 1
    %p75 = por %p73, %p74
    %p77 = scmp.ne.s32.totalorder %s62, %s76
    %p78 = scmp.eq.s32.totalorder %s17, 0
    %p79 = por %p77, %p78
    %s81 = sadd.s32 %s80, 1
    %p84 = scmp.eq.s32.totalorder %s11, 1
    %p85 = scmp.ne.s32.totalorder %s80, %s82
    %p86 = scmp.eq.s32.totalorder %s11, 0
    %p87 = por %p85, %p86
    %p88 = scmp.ne.s32.totalorder %s80, %s82
    %p89 = scmp.eq.s32.totalorder %s16, 1
    %p90 = por %p88, %p89
    %p91 = scmp.ne.s32.totalorder %s82, %s83
    %p92 = scmp.eq.s32.totalorder %s16, 0
    %p93 = por %p91, %p92
    %p94 = scmp.ne.s32.totalorder %s82, %s83
    %p95 = scmp.eq.s32.totalorder %s17, 1
    %p96 = por %p94, %p95
    %p98 = scmp.ne.s32.totalorder %s83, %s97
    %p99 = scmp.eq.s32.totalorder %s17, 0
    %p100 = por %p98, %p99
    %s102 = sadd.s32 %s101, 1
    %p105 = scmp.eq.s32.totalorder %s11, 1
    %p106 = scmp.ne.s32.totalorder %s101, %s103
    %p107 = scmp.eq.s32.totalorder %s11, 0
    %p108 = por %p106, %p107
    %p109 = scmp.ne.s32.totalorder %s101, %s103
    %p110 = scmp.eq.s32.totalorder %s16, 1
    %p111 = por %p109, %p110
    %p112 = scmp.ne.s32.totalorder %s103, %s104
    %p113 = scmp.eq.s32.totalorder %s16, 0
    %p114 = por %p112, %p113
    %p115 = scmp.ne.s32.totalorder %s103, %s104
    %p116 = scmp.eq.s32.totalorder %s17, 1
    %p117 = por %p115, %p116
    %p119 = scmp.ne.s32.totalorder %s104, %s118
    %p120 = scmp.eq.s32.totalorder %s17, 0
    %p121 = por %p119, %p120
    %s123 = sadd.s32 %s122, 1
    %p126 = scmp.eq.s32.totalorder %s11, 1
    %p127 = scmp.ne.s32.totalorder %s122, %s124
    %p128 = scmp.eq.s32.totalorder %s11, 0
    %p129 = por %p127, %p128
    %p130 = scmp.ne.s32.totalorder %s122, %s124
    %p131 = scmp.eq.s32.totalorder %s16, 1
    %p132 = por %p130, %p131
    %p133 = scmp.ne.s32.totalorder %s124, %s125
    %p134 = scmp.eq.s32.totalorder %s16, 0
    %p135 = por %p133, %p134
    %p136 = scmp.ne.s32.totalorder %s124, %s125
    %p137 = scmp.eq.s32.totalorder %s17, 1
    %p138 = por %p136, %p137
    %p140 = scmp.ne.s32.totalorder %s125, %s139
    %p141 = scmp.eq.s32.totalorder %s17, 0
    %p142 = por %p140, %p141
    %s143 = ssub.s32 %s18, %s30
    %s144 = ssub.s32 %s19, %s26
    %s145 = sor.u32 %s143, %s144
    %p146 = scmp.eq.s32.totalorder %s145, 0
    %s148 = sadd.s32 %s147, 1
    %s149 = scalar_select %p146, %s147, %s148
    %p152 = pneg %p146
    %p153 = scmp.eq.s32.totalorder %s11, 1
    %p154 = por %p152, %p153
    %p155 = scmp.ne.s32.totalorder %s147, %s150
    %p156 = scmp.eq.s32.totalorder %s11, 0
    %p157 = por %p155, %p156
    %p158 = scmp.ne.s32.totalorder %s147, %s150
    %p159 = scmp.eq.s32.totalorder %s16, 1
    %p160 = por %p158, %p159
    %p161 = scmp.ne.s32.totalorder %s150, %s151
    %p162 = scmp.eq.s32.totalorder %s16, 0
    %p163 = por %p161, %p162
    %p164 = scmp.ne.s32.totalorder %s150, %s151
    %p165 = scmp.eq.s32.totalorder %s17, 1
    %p166 = por %p164, %p165
    %p168 = scmp.ne.s32.totalorder %s151, %s167
    %p169 = scmp.eq.s32.totalorder %s17, 0
    %p170 = por %p168, %p169
    %p171 = scmp.le.s32.totalorder 1, %s11
    %p172 = scmp.lt.s32.totalorder %s11, 3
    %p173 = pnand %p171, %p172
    %p174 = pneg %p173
    // Predicated region
    $region9: #{interaction_forward.1} parent=5 // pred_check
      _
    $region10: #{interaction_forward.1} parent=5 // pred_check_branch
      %176 = sbr.rel (%p173) target = $region12
    $region11: #{interaction_forward.1} parent=5 // pred_region
      %s177 = ssub.s32 %s11, 1
      // Predicated region
      $region13: #{interaction_forward.1} parent=11 // pred_check
        %p178 = pneg %p72
      $region14: #{interaction_forward.1} parent=11 // pred_check_branch
        %180 = sbr.rel (%p178) target = $region16
      $region15: #{interaction_forward.1} parent=11 // pred_region
        _
      $region16: #{interaction_forward.1} parent=11 // pred_fallthru
        _
      // Predicated region
      $region17: #{interaction_forward.1} parent=11 // pred_check
        %p181 = pneg %p93
      $region18: #{interaction_forward.1} parent=11 // pred_check_branch
        %183 = sbr.rel (%p181) target = $region20
      $region19: #{interaction_forward.1} parent=11 // pred_region
        _
      $region20: #{interaction_forward.1} parent=11 // pred_fallthru
        _
      // Predicated region
      $region21: #{interaction_forward.1} parent=11 // pred_check
        %p184 = pneg %p114
      $region22: #{interaction_forward.1} parent=11 // pred_check_branch
        %186 = sbr.rel (%p184) target = $region24
      $region23: #{interaction_forward.1} parent=11 // pred_region
        _
      $region24: #{interaction_forward.1} parent=11 // pred_fallthru
        _
      // Predicated region
      $region25: #{interaction_forward.1} parent=11 // pred_check
        %p187 = pneg %p135
      $region26: #{interaction_forward.1} parent=11 // pred_check_branch
        %189 = sbr.rel (%p187) target = $region28
      $region27: #{interaction_forward.1} parent=11 // pred_region
        _
      $region28: #{interaction_forward.1} parent=11 // pred_fallthru
        _
    $region12: #{interaction_forward.1} parent=5 // pred_fallthru
      _
    %p190 = scmp.lt.s32.totalorder %s11, 2
    // Predicated region
    $region29: #{interaction_forward.1} parent=5 // pred_check
      %p191 = pneg %p190
    $region30: #{interaction_forward.1} parent=5 // pred_check_branch
      %193 = sbr.rel (%p191) target = $region32
    $region31: #{interaction_forward.1} parent=5 // pred_region
      // Predicated region
      $region33: #{interaction_forward.1} parent=31 // pred_check
        %p194 = pneg %p45
      $region34: #{interaction_forward.1} parent=31 // pred_check_branch
        %196 = sbr.rel (%p194) target = $region36
      $region35: #{interaction_forward.1} parent=31 // pred_region
        %s197 = smul.u32 2, %s19
        %p198 = scmp.lt.s32.totalorder %s18, 1
        %s199 = scalar_select %p198, %s18, 1
        %p200 = scmp.lt.s32.totalorder %s197, 1
        %s201 = scalar_select %p200, %s197, 1
        %s202 = smul.addr %s199, 32
        %s203 = sadd.s32 %s201, %s202
        %s204 = smul.addr %s203, 8
        %s205 = scalar_lea.vmem %s0, %s204
        %s206 = smul.u32 2, %s19
      $region36: #{interaction_forward.1} parent=31 // pred_fallthru
        _
    $region32: #{interaction_forward.1} parent=5 // pred_fallthru
      _
    %p207 = scmp.le.s32.totalorder 1, %s11
    %p208 = scmp.lt.s32.totalorder %s11, 3
    %p209 = pnand %p207, %p208
    %p210 = pneg %p209
    // Predicated region
    $region37: #{interaction_forward.1} parent=5 // pred_check
      _
    $region38: #{interaction_forward.1} parent=5 // pred_check_branch
      %212 = sbr.rel (%p209) target = $region40
    $region39: #{interaction_forward.1} parent=5 // pred_region
      %s213 = ssub.s32 %s11, 1
      %s214 = smul.u32 2, %s21
      %p215 = scmp.lt.s32.totalorder %s20, 1
      %s216 = scalar_select %p215, %s20, 1
      %p217 = scmp.lt.s32.totalorder %s214, 1
      %s218 = scalar_select %p217, %s214, 1
      %s219 = smul.addr %s216, 32
      %s220 = sadd.s32 %s218, %s219
      %s221 = smul.addr %s220, 8
      %s222 = scalar_lea.vmem %s0, %s221
      %p223 = pneg %p51
      %p224 = pneg %p48
      %p225 = pneg %p72
      %p226 = pneg %p69
      %p227 = pneg %p93
      %p228 = pneg %p90
      %p229 = pneg %p114
      %p230 = pneg %p111
      %p231 = pneg %p135
      %p232 = pneg %p132
      %p233 = pneg %p163
      %p234 = pneg %p160
      %s235 = smul.u32 2, %s21
      %p236 = scmp.lt.s32.totalorder %s20, 1
      %s237 = scalar_select %p236, %s20, 1
      %p238 = scmp.lt.s32.totalorder %s235, 1
      %s239 = scalar_select %p238, %s235, 1
      %s240 = smul.addr %s237, 32
      %s241 = sadd.s32 %s239, %s240
      %s242 = smul.addr %s241, 8
      %s243 = scalar_lea.vmem %s5, %s242
      %s244 = smul.u32 2, %s21
      %p245 = scmp.lt.s32.totalorder %s20, 1
      %s246 = scalar_select %p245, %s20, 1
      %p247 = scmp.lt.s32.totalorder %s244, 1
      %s248 = scalar_select %p247, %s244, 1
      %s249 = smul.addr %s246, 32
      %s250 = sadd.s32 %s248, %s249
      %s251 = smul.addr %s250, 8
      %s252 = scalar_lea.vmem %s0, %s251
      %s253 = smul.u32 2, %s21
      %s254 = smul.u32 2, %s21
      %p255 = scmp.lt.s32.totalorder %s20, 1
      %s256 = scalar_select %p255, %s20, 1
      %p257 = scmp.lt.s32.totalorder %s254, 1
      %s258 = scalar_select %p257, %s254, 1
      %s259 = smul.addr %s256, 32
      %s260 = sadd.s32 %s258, %s259
      %s261 = smul.addr %s260, 8
      %s262 = scalar_lea.vmem %s5, %s261
      %s263 = smul.u32 2, %s21
      %v264 = vld [vmem:[%s252] sm:$0xff]
      %v265 = vld [vmem:[%s252 + $0x8] sm:$0xff]
      %v266 = vld [vmem:[%s252 + $0x10] sm:$0xff]
      %v267 = vld [vmem:[%s252 + $0x18] sm:$0xff]
      %v268 = vld [vmem:[%s252 + $0x20] sm:$0xff]
      %v269 = vld [vmem:[%s252 + $0x28] sm:$0xff]
      %v270 = vld [vmem:[%s252 + $0x30] sm:$0xff]
      %v271 = vld [vmem:[%s252 + $0x38] sm:$0xff]
      %v272 = vld [vmem:[%s252 + $0x40] sm:$0xff]
      %v273 = vld [vmem:[%s252 + $0x48] sm:$0xff]
      %v274 = vld [vmem:[%s252 + $0x50] sm:$0xff]
      %v275 = vld [vmem:[%s252 + $0x58] sm:$0xff]
      %v276 = vld [vmem:[%s252 + $0x60] sm:$0xff]
      %v277 = vld [vmem:[%s252 + $0x68] sm:$0xff]
      %v278 = vld [vmem:[%s252 + $0x70] sm:$0xff]
      %v279 = vld [vmem:[%s252 + $0x78] sm:$0xff]
      %v280 = vld [vmem:[%s252 + $0x80] sm:$0xff]
      %v281 = vld [vmem:[%s252 + $0x88] sm:$0xff]
      %v282 = vld [vmem:[%s252 + $0x90] sm:$0xff]
      %v283 = vld [vmem:[%s252 + $0x98] sm:$0xff]
      %v284 = vld [vmem:[%s252 + $0xa0] sm:$0xff]
      %v285 = vld [vmem:[%s252 + $0xa8] sm:$0xff]
      %v286 = vld [vmem:[%s252 + $0xb0] sm:$0xff]
      %v287 = vld [vmem:[%s252 + $0xb8] sm:$0xff]
      %v288 = vld [vmem:[%s252 + $0xc0] sm:$0xff]
      %v289 = vld [vmem:[%s252 + $0xc8] sm:$0xff]
      %v290 = vld [vmem:[%s252 + $0xd0] sm:$0xff]
      %v291 = vld [vmem:[%s252 + $0xd8] sm:$0xff]
      %v292 = vld [vmem:[%s252 + $0xe0] sm:$0xff]
      %v293 = vld [vmem:[%s252 + $0xe8] sm:$0xff]
      %v294 = vld [vmem:[%s252 + $0xf0] sm:$0xff]
      %v295 = vld [vmem:[%s252 + $0xf8] sm:$0xff]
      %v296 = vld [vmem:[%s1] sm:$0xff]
      %v297 = vld [vmem:[%s1 + $0x8] sm:$0xff]
      %v298 = vld [vmem:[%s1 + $0x10] sm:$0xff]
      %v299 = vld [vmem:[%s1 + $0x18] sm:$0xff]
      %v300 = vld [vmem:[%s1 + $0x20] sm:$0xff]
      %v301 = vld [vmem:[%s1 + $0x28] sm:$0xff]
      %v302 = vld [vmem:[%s1 + $0x30] sm:$0xff]
      %v303 = vld [vmem:[%s1 + $0x38] sm:$0xff]
      %v304 = vld [vmem:[%s1 + $0x40] sm:$0xff]
      %v305 = vld [vmem:[%s1 + $0x48] sm:$0xff]
      %v306 = vld [vmem:[%s1 + $0x50] sm:$0xff]
      %v307 = vld [vmem:[%s1 + $0x58] sm:$0xff]
      %v308 = vld [vmem:[%s1 + $0x60] sm:$0xff]
      %v309 = vld [vmem:[%s1 + $0x68] sm:$0xff]
      %v310 = vld [vmem:[%s1 + $0x70] sm:$0xff]
      %v311 = vld [vmem:[%s1 + $0x78] sm:$0xff]
      %v312 = vld [vmem:[%s2] sm:$0xff]
      %v313 = vld [vmem:[%s2 + $0x8] sm:$0xff]
      %v314 = vld [vmem:[%s2 + $0x10] sm:$0xff]
      %v315 = vld [vmem:[%s2 + $0x18] sm:$0xff]
      %v316 = vld [vmem:[%s2 + $0x20] sm:$0xff]
      %v317 = vld [vmem:[%s2 + $0x28] sm:$0xff]
      %v318 = vld [vmem:[%s2 + $0x30] sm:$0xff]
      %v319 = vld [vmem:[%s2 + $0x38] sm:$0xff]
      %v320 = vld [vmem:[%s2 + $0x40] sm:$0xff]
      %v321 = vld [vmem:[%s2 + $0x48] sm:$0xff]
      %v322 = vld [vmem:[%s2 + $0x50] sm:$0xff]
      %v323 = vld [vmem:[%s2 + $0x58] sm:$0xff]
      %v324 = vld [vmem:[%s2 + $0x60] sm:$0xff]
      %v325 = vld [vmem:[%s2 + $0x68] sm:$0xff]
      %v326 = vld [vmem:[%s2 + $0x70] sm:$0xff]
      %v327 = vld [vmem:[%s2 + $0x78] sm:$0xff]
      %329 = vset.pattern.permute.xlu0 0
      %330 = vperm.xlu0 %329, %v312
      %v331 = vpop.permute.xlu0 %330
      %334 = vset.pattern.permute.xlu0 0
      %335 = vperm.xlu0 %334, %v313
      %v336 = vpop.permute.xlu0 %335
      %339 = vset.pattern.permute.xlu0 0
      %340 = vperm.xlu0 %339, %v314
      %v341 = vpop.permute.xlu0 %340
      %344 = vset.pattern.permute.xlu0 0
      %345 = vperm.xlu0 %344, %v315
      %v346 = vpop.permute.xlu0 %345
      %349 = vset.pattern.permute.xlu0 0
      %350 = vperm.xlu0 %349, %v316
      %v351 = vpop.permute.xlu0 %350
      %354 = vset.pattern.permute.xlu0 0
      %355 = vperm.xlu0 %354, %v317
      %v356 = vpop.permute.xlu0 %355
      %359 = vset.pattern.permute.xlu0 0
      %360 = vperm.xlu0 %359, %v318
      %v361 = vpop.permute.xlu0 %360
      %364 = vset.pattern.permute.xlu0 0
      %365 = vperm.xlu0 %364, %v319
      %v366 = vpop.permute.xlu0 %365
      %369 = vset.pattern.permute.xlu0 0
      %370 = vperm.xlu0 %369, %v320
      %v371 = vpop.permute.xlu0 %370
      %374 = vset.pattern.permute.xlu0 0
      %375 = vperm.xlu0 %374, %v321
      %v376 = vpop.permute.xlu0 %375
      %379 = vset.pattern.permute.xlu0 0
      %380 = vperm.xlu0 %379, %v322
      %v381 = vpop.permute.xlu0 %380
      %384 = vset.pattern.permute.xlu0 0
      %385 = vperm.xlu0 %384, %v323
      %v386 = vpop.permute.xlu0 %385
      %389 = vset.pattern.permute.xlu0 0
      %390 = vperm.xlu0 %389, %v324
      %v391 = vpop.permute.xlu0 %390
      %394 = vset.pattern.permute.xlu0 0
      %395 = vperm.xlu0 %394, %v325
      %v396 = vpop.permute.xlu0 %395
      %399 = vset.pattern.permute.xlu0 0
      %400 = vperm.xlu0 %399, %v326
      %v401 = vpop.permute.xlu0 %400
      %404 = vset.pattern.permute.xlu0 0
      %405 = vperm.xlu0 %404, %v327
      %v406 = vpop.permute.xlu0 %405
      %408 = vmatpush.msra.mxu0 %v294
      %409 = vmatpush.msra.mxu0 %v292
      %410 = vmatpush.msra.mxu0 %v290
      %411 = vmatpush.msra.mxu0 %v288
      %412 = vmatpush.msra.mxu0 %v286
      %413 = vmatpush.msra.mxu0 %v284
      %414 = vmatpush.msra.mxu0 %v282
      %415 = vmatpush.msra.mxu0 %v280
      %416 = vmatpush.msra.mxu0 %v278
      %417 = vmatpush.msra.mxu0 %v276
      %418 = vmatpush.msra.mxu0 %v274
      %419 = vmatpush.msra.mxu0 %v272
      %420 = vmatpush.msra.mxu0 %v270
      %421 = vmatpush.msra.mxu0 %v268
      %422 = vmatpush.msra.mxu0 %v266
      %423 = vmatpush.msra.mxu0 %v264
      %424 = vmatmul.f32.gmra.mxu0 %v296
      %v425 = vpop.f32.mrf.mxu0
      %v426 = vadd.f32 %v331, %v425
      %427 = vmatmul.f32.gmra.mxu0 %v297
      %v428 = vpop.f32.mrf.mxu0
      %v429 = vadd.f32 %v336, %v428
      %430 = vmatmul.f32.gmra.mxu0 %v298
      %v431 = vpop.f32.mrf.mxu0
      %v432 = vadd.f32 %v341, %v431
      %433 = vmatmul.f32.gmra.mxu0 %v299
      %v434 = vpop.f32.mrf.mxu0
      %v435 = vadd.f32 %v346, %v434
      %436 = vmatmul.f32.gmra.mxu0 %v300
      %v437 = vpop.f32.mrf.mxu0
      %v438 = vadd.f32 %v351, %v437
      %439 = vmatmul.f32.gmra.mxu0 %v301
      %v440 = vpop.f32.mrf.mxu0
      %v441 = vadd.f32 %v356, %v440
      %442 = vmatmul.f32.gmra.mxu0 %v302
      %v443 = vpop.f32.mrf.mxu0
      %v444 = vadd.f32 %v361, %v443
      %445 = vmatmul.f32.gmra.mxu0 %v303
      %v446 = vpop.f32.mrf.mxu0
      %v447 = vadd.f32 %v366, %v446
      %448 = vmatmul.f32.gmra.mxu0 %v304
      %v449 = vpop.f32.mrf.mxu0
      %v450 = vadd.f32 %v371, %v449
      %451 = vmatmul.f32.gmra.mxu0 %v305
      %v452 = vpop.f32.mrf.mxu0
      %v453 = vadd.f32 %v376, %v452
      %454 = vmatmul.f32.gmra.mxu0 %v306
      %v455 = vpop.f32.mrf.mxu0
      %v456 = vadd.f32 %v381, %v455
      %457 = vmatmul.f32.gmra.mxu0 %v307
      %v458 = vpop.f32.mrf.mxu0
      %v459 = vadd.f32 %v386, %v458
      %460 = vmatmul.f32.gmra.mxu0 %v308
      %v461 = vpop.f32.mrf.mxu0
      %v462 = vadd.f32 %v391, %v461
      %463 = vmatmul.f32.gmra.mxu0 %v309
      %v464 = vpop.f32.mrf.mxu0
      %v465 = vadd.f32 %v396, %v464
      %466 = vmatmul.f32.gmra.mxu0 %v310
      %v467 = vpop.f32.mrf.mxu0
      %v468 = vadd.f32 %v401, %v467
      %469 = vmatmul.f32.gmra.mxu0 %v311
      %v470 = vpop.f32.mrf.mxu0
      %v471 = vadd.f32 %v406, %v470
      %472 = vdwg.mxu0
      %473 = vmatpush.msra.mxu0 %v295
      %474 = vmatpush.msra.mxu0 %v293
      %475 = vmatpush.msra.mxu0 %v291
      %476 = vmatpush.msra.mxu0 %v289
      %477 = vmatpush.msra.mxu0 %v287
      %478 = vmatpush.msra.mxu0 %v285
      %479 = vmatpush.msra.mxu0 %v283
      %480 = vmatpush.msra.mxu0 %v281
      %481 = vmatpush.msra.mxu0 %v279
      %482 = vmatpush.msra.mxu0 %v277
      %483 = vmatpush.msra.mxu0 %v275
      %484 = vmatpush.msra.mxu0 %v273
      %485 = vmatpush.msra.mxu0 %v271
      %486 = vmatpush.msra.mxu0 %v269
      %487 = vmatpush.msra.mxu0 %v267
      %488 = vmatpush.msra.mxu0 %v265
      %489 = vmatmul.f32.gmra.mxu0 %v296
      %v490 = vpop.f32.mrf.mxu0
      %v491 = vadd.f32 %v331, %v490
      %492 = vmatmul.f32.gmra.mxu0 %v297
      %v493 = vpop.f32.mrf.mxu0
      %v494 = vadd.f32 %v336, %v493
      %495 = vmatmul.f32.gmra.mxu0 %v298
      %v496 = vpop.f32.mrf.mxu0
      %v497 = vadd.f32 %v341, %v496
      %498 = vmatmul.f32.gmra.mxu0 %v299
      %v499 = vpop.f32.mrf.mxu0
      %v500 = vadd.f32 %v346, %v499
      %501 = vmatmul.f32.gmra.mxu0 %v300
      %v502 = vpop.f32.mrf.mxu0
      %v503 = vadd.f32 %v351, %v502
      %504 = vmatmul.f32.gmra.mxu0 %v301
      %v505 = vpop.f32.mrf.mxu0
      %v506 = vadd.f32 %v356, %v505
      %507 = vmatmul.f32.gmra.mxu0 %v302
      %v508 = vpop.f32.mrf.mxu0
      %v509 = vadd.f32 %v361, %v508
      %510 = vmatmul.f32.gmra.mxu0 %v303
      %v511 = vpop.f32.mrf.mxu0
      %v512 = vadd.f32 %v366, %v511
      %513 = vmatmul.f32.gmra.mxu0 %v304
      %v514 = vpop.f32.mrf.mxu0
      %v515 = vadd.f32 %v371, %v514
      %516 = vmatmul.f32.gmra.mxu0 %v305
      %v517 = vpop.f32.mrf.mxu0
      %v518 = vadd.f32 %v376, %v517
      %519 = vmatmul.f32.gmra.mxu0 %v306
      %v520 = vpop.f32.mrf.mxu0
      %v521 = vadd.f32 %v381, %v520
      %522 = vmatmul.f32.gmra.mxu0 %v307
      %v523 = vpop.f32.mrf.mxu0
      %v524 = vadd.f32 %v386, %v523
      %525 = vmatmul.f32.gmra.mxu0 %v308
      %v526 = vpop.f32.mrf.mxu0
      %v527 = vadd.f32 %v391, %v526
      %528 = vmatmul.f32.gmra.mxu0 %v309
      %v529 = vpop.f32.mrf.mxu0
      %v530 = vadd.f32 %v396, %v529
      %531 = vmatmul.f32.gmra.mxu0 %v310
      %v532 = vpop.f32.mrf.mxu0
      %v533 = vadd.f32 %v401, %v532
      %534 = vmatmul.f32.gmra.mxu0 %v311
      %v535 = vpop.f32.mrf.mxu0
      %v536 = vadd.f32 %v406, %v535
      %537 = vdwg.mxu0
      %v538 = vand.u32 2147483647, %v426
      %v539 = vand.u32 2147483647, %v491
      %v540 = vand.u32 2147483647, %v429
      %v541 = vand.u32 2147483647, %v494
      %v542 = vand.u32 2147483647, %v432
      %v543 = vand.u32 2147483647, %v497
      %v544 = vand.u32 2147483647, %v435
      %v545 = vand.u32 2147483647, %v500
      %v546 = vand.u32 2147483647, %v438
      %v547 = vand.u32 2147483647, %v503
      %v548 = vand.u32 2147483647, %v441
      %v549 = vand.u32 2147483647, %v506
      %v550 = vand.u32 2147483647, %v444
      %v551 = vand.u32 2147483647, %v509
      %v552 = vand.u32 2147483647, %v447
      %v553 = vand.u32 2147483647, %v512
      %v554 = vand.u32 2147483647, %v450
      %v555 = vand.u32 2147483647, %v515
      %v556 = vand.u32 2147483647, %v453
      %v557 = vand.u32 2147483647, %v518
      %v558 = vand.u32 2147483647, %v456
      %v559 = vand.u32 2147483647, %v521
      %v560 = vand.u32 2147483647, %v459
      %v561 = vand.u32 2147483647, %v524
      %v562 = vand.u32 2147483647, %v462
      %v563 = vand.u32 2147483647, %v527
      %v564 = vand.u32 2147483647, %v465
      %v565 = vand.u32 2147483647, %v530
      %v566 = vand.u32 2147483647, %v468
      %v567 = vand.u32 2147483647, %v533
      %v568 = vand.u32 2147483647, %v471
      %v569 = vand.u32 2147483647, %v536
      %v570 = vmul.f32 %v538, 0.70710677
      %v571 = vmul.f32 %v539, 0.70710677
      %v572 = vmul.f32 %v540, 0.70710677
      %v573 = vmul.f32 %v541, 0.70710677
      %v574 = vmul.f32 %v542, 0.70710677
      %v575 = vmul.f32 %v543, 0.70710677
      %v576 = vmul.f32 %v544, 0.70710677
      %v577 = vmul.f32 %v545, 0.70710677
      %v578 = vmul.f32 %v546, 0.70710677
      %v579 = vmul.f32 %v547, 0.70710677
      %v580 = vmul.f32 %v548, 0.70710677
      %v581 = vmul.f32 %v549, 0.70710677
      %v582 = vmul.f32 %v550, 0.70710677
      %v583 = vmul.f32 %v551, 0.70710677
      %v584 = vmul.f32 %v552, 0.70710677
      %v585 = vmul.f32 %v553, 0.70710677
      %v586 = vmul.f32 %v554, 0.70710677
      %v587 = vmul.f32 %v555, 0.70710677
      %v588 = vmul.f32 %v556, 0.70710677
      %v589 = vmul.f32 %v557, 0.70710677
      %v590 = vmul.f32 %v558, 0.70710677
      %v591 = vmul.f32 %v559, 0.70710677
      %v592 = vmul.f32 %v560, 0.70710677
      %v593 = vmul.f32 %v561, 0.70710677
      %v594 = vmul.f32 %v562, 0.70710677
      %v595 = vmul.f32 %v563, 0.70710677
      %v596 = vmul.f32 %v564, 0.70710677
      %v597 = vmul.f32 %v565, 0.70710677
      %v598 = vmul.f32 %v566, 0.70710677
      %v599 = vmul.f32 %v567, 0.70710677
      %v600 = vmul.f32 %v568, 0.70710677
      %v601 = vmul.f32 %v569, 0.70710677
      %v602 = vmul.f32 %v570, 0.3275911
      %v603 = vmul.f32 %v571, 0.3275911
      %v604 = vmul.f32 %v572, 0.3275911
      %v605 = vmul.f32 %v573, 0.3275911
      %v606 = vmul.f32 %v574, 0.3275911
      %v607 = vmul.f32 %v575, 0.3275911
      %v608 = vmul.f32 %v576, 0.3275911
      %v609 = vmul.f32 %v577, 0.3275911
      %v610 = vmul.f32 %v578, 0.3275911
      %v611 = vmul.f32 %v579, 0.3275911
      %v612 = vmul.f32 %v580, 0.3275911
      %v613 = vmul.f32 %v581, 0.3275911
      %v614 = vmul.f32 %v582, 0.3275911
      %v615 = vmul.f32 %v583, 0.3275911
      %v616 = vmul.f32 %v584, 0.3275911
      %v617 = vmul.f32 %v585, 0.3275911
      %v618 = vmul.f32 %v586, 0.3275911
      %v619 = vmul.f32 %v587, 0.3275911
      %v620 = vmul.f32 %v588, 0.3275911
      %v621 = vmul.f32 %v589, 0.3275911
      %v622 = vmul.f32 %v590, 0.3275911
      %v623 = vmul.f32 %v591, 0.3275911
      %v624 = vmul.f32 %v592, 0.3275911
      %v625 = vmul.f32 %v593, 0.3275911
      %v626 = vmul.f32 %v594, 0.3275911
      %v627 = vmul.f32 %v595, 0.3275911
      %v628 = vmul.f32 %v596, 0.3275911
      %v629 = vmul.f32 %v597, 0.3275911
      %v630 = vmul.f32 %v598, 0.3275911
      %v631 = vmul.f32 %v599, 0.3275911
      %v632 = vmul.f32 %v600, 0.3275911
      %v633 = vmul.f32 %v601, 0.3275911
      %v634 = vadd.f32 %v602, 1.0
      %v635 = vadd.f32 %v603, 1.0
      %v636 = vadd.f32 %v604, 1.0
      %v637 = vadd.f32 %v605, 1.0
      %v638 = vadd.f32 %v606, 1.0
      %v639 = vadd.f32 %v607, 1.0
      %v640 = vadd.f32 %v608, 1.0
      %v641 = vadd.f32 %v609, 1.0
      %v642 = vadd.f32 %v610, 1.0
      %v643 = vadd.f32 %v611, 1.0
      %v644 = vadd.f32 %v612, 1.0
      %v645 = vadd.f32 %v613, 1.0
      %v646 = vadd.f32 %v614, 1.0
      %v647 = vadd.f32 %v615, 1.0
      %v648 = vadd.f32 %v616, 1.0
      %v649 = vadd.f32 %v617, 1.0
      %v650 = vadd.f32 %v618, 1.0
      %v651 = vadd.f32 %v619, 1.0
      %v652 = vadd.f32 %v620, 1.0
      %v653 = vadd.f32 %v621, 1.0
      %v654 = vadd.f32 %v622, 1.0
      %v655 = vadd.f32 %v623, 1.0
      %v656 = vadd.f32 %v624, 1.0
      %v657 = vadd.f32 %v625, 1.0
      %v658 = vadd.f32 %v626, 1.0
      %v659 = vadd.f32 %v627, 1.0
      %v660 = vadd.f32 %v628, 1.0
      %v661 = vadd.f32 %v629, 1.0
      %v662 = vadd.f32 %v630, 1.0
      %v663 = vadd.f32 %v631, 1.0
      %v664 = vadd.f32 %v632, 1.0
      %v665 = vadd.f32 %v633, 1.0
      %v666 = vrcp.pop %v634
      %v667 = vrcp.pop %v635
      %v668 = vrcp.pop %v636
      %v669 = vrcp.pop %v637
      %v670 = vrcp.pop %v638
      %v671 = vrcp.pop %v639
      %v672 = vrcp.pop %v640
      %v673 = vrcp.pop %v641
      %v674 = vrcp.pop %v642
      %v675 = vrcp.pop %v643
      %v676 = vrcp.pop %v644
      %v677 = vrcp.pop %v645
      %v678 = vrcp.pop %v646
      %v679 = vrcp.pop %v647
      %v680 = vrcp.pop %v648
      %v681 = vrcp.pop %v649
      %v682 = vrcp.pop %v650
      %v683 = vrcp.pop %v651
      %v684 = vrcp.pop %v652
      %v685 = vrcp.pop %v653
      %v686 = vrcp.pop %v654
      %v687 = vrcp.pop %v655
      %v688 = vrcp.pop %v656
      %v689 = vrcp.pop %v657
      %v690 = vrcp.pop %v658
      %v691 = vrcp.pop %v659
      %v692 = vrcp.pop %v660
      %v693 = vrcp.pop %v661
      %v694 = vrcp.pop %v662
      %v695 = vrcp.pop %v663
      %v696 = vrcp.pop %v664
      %v697 = vrcp.pop %v665
      %v698 = vmul.f32 %v666, 1.0614054
      %v699 = vmul.f32 %v667, 1.0614054
      %v700 = vmul.f32 %v668, 1.0614054
      %v701 = vmul.f32 %v669, 1.0614054
      %v702 = vmul.f32 %v670, 1.0614054
      %v703 = vmul.f32 %v671, 1.0614054
      %v704 = vmul.f32 %v672, 1.0614054
      %v705 = vmul.f32 %v673, 1.0614054
      %v706 = vmul.f32 %v674, 1.0614054
      %v707 = vmul.f32 %v675, 1.0614054
      %v708 = vmul.f32 %v676, 1.0614054
      %v709 = vmul.f32 %v677, 1.0614054
      %v710 = vmul.f32 %v678, 1.0614054
      %v711 = vmul.f32 %v679, 1.0614054
      %v712 = vmul.f32 %v680, 1.0614054
      %v713 = vmul.f32 %v681, 1.0614054
      %v714 = vmul.f32 %v682, 1.0614054
      %v715 = vmul.f32 %v683, 1.0614054
      %v716 = vmul.f32 %v684, 1.0614054
      %v717 = vmul.f32 %v685, 1.0614054
      %v718 = vmul.f32 %v686, 1.0614054
      %v719 = vmul.f32 %v687, 1.0614054
      %v720 = vmul.f32 %v688, 1.0614054
      %v721 = vmul.f32 %v689, 1.0614054
      %v722 = vmul.f32 %v690, 1.0614054
      %v723 = vmul.f32 %v691, 1.0614054
      %v724 = vmul.f32 %v692, 1.0614054
      %v725 = vmul.f32 %v693, 1.0614054
      %v726 = vmul.f32 %v694, 1.0614054
      %v727 = vmul.f32 %v695, 1.0614054
      %v728 = vmul.f32 %v696, 1.0614054
      %v729 = vmul.f32 %v697, 1.0614054
      %v730 = vadd.f32 %v698, -1.4531521
      %v731 = vadd.f32 %v699, -1.4531521
      %v732 = vadd.f32 %v700, -1.4531521
      %v733 = vadd.f32 %v701, -1.4531521
      %v734 = vadd.f32 %v702, -1.4531521
      %v735 = vadd.f32 %v703, -1.4531521
      %v736 = vadd.f32 %v704, -1.4531521
      %v737 = vadd.f32 %v705, -1.4531521
      %v738 = vadd.f32 %v706, -1.4531521
      %v739 = vadd.f32 %v707, -1.4531521
      %v740 = vadd.f32 %v708, -1.4531521
      %v741 = vadd.f32 %v709, -1.4531521
      %v742 = vadd.f32 %v710, -1.4531521
      %v743 = vadd.f32 %v711, -1.4531521
      %v744 = vadd.f32 %v712, -1.4531521
      %v745 = vadd.f32 %v713, -1.4531521
      %v746 = vadd.f32 %v714, -1.4531521
      %v747 = vadd.f32 %v715, -1.4531521
      %v748 = vadd.f32 %v716, -1.4531521
      %v749 = vadd.f32 %v717, -1.4531521
      %v750 = vadd.f32 %v718, -1.4531521
      %v751 = vadd.f32 %v719, -1.4531521
      %v752 = vadd.f32 %v720, -1.4531521
      %v753 = vadd.f32 %v721, -1.4531521
      %v754 = vadd.f32 %v722, -1.4531521
      %v755 = vadd.f32 %v723, -1.4531521
      %v756 = vadd.f32 %v724, -1.4531521
      %v757 = vadd.f32 %v725, -1.4531521
      %v758 = vadd.f32 %v726, -1.4531521
      %v759 = vadd.f32 %v727, -1.4531521
      %v760 = vadd.f32 %v728, -1.4531521
      %v761 = vadd.f32 %v729, -1.4531521
      %v762 = vmul.f32 %v730, %v666
      %v763 = vmul.f32 %v731, %v667
      %v764 = vmul.f32 %v732, %v668
      %v765 = vmul.f32 %v733, %v669
      %v766 = vmul.f32 %v734, %v670
      %v767 = vmul.f32 %v735, %v671
      %v768 = vmul.f32 %v736, %v672
      %v769 = vmul.f32 %v737, %v673
      %v770 = vmul.f32 %v738, %v674
      %v771 = vmul.f32 %v739, %v675
      %v772 = vmul.f32 %v740, %v676
      %v773 = vmul.f32 %v741, %v677
      %v774 = vmul.f32 %v742, %v678
      %v775 = vmul.f32 %v743, %v679
      %v776 = vmul.f32 %v744, %v680
      %v777 = vmul.f32 %v745, %v681
      %v778 = vmul.f32 %v746, %v682
      %v779 = vmul.f32 %v747, %v683
      %v780 = vmul.f32 %v748, %v684
      %v781 = vmul.f32 %v749, %v685
      %v782 = vmul.f32 %v750, %v686
      %v783 = vmul.f32 %v751, %v687
      %v784 = vmul.f32 %v752, %v688
      %v785 = vmul.f32 %v753, %v689
      %v786 = vmul.f32 %v754, %v690
      %v787 = vmul.f32 %v755, %v691
      %v788 = vmul.f32 %v756, %v692
      %v789 = vmul.f32 %v757, %v693
      %v790 = vmul.f32 %v758, %v694
      %v791 = vmul.f32 %v759, %v695
      %v792 = vmul.f32 %v760, %v696
      %v793 = vmul.f32 %v761, %v697
      %v794 = vadd.f32 %v762, 1.4214138
      %v795 = vadd.f32 %v763, 1.4214138
      %v796 = vadd.f32 %v764, 1.4214138
      %v797 = vadd.f32 %v765, 1.4214138
      %v798 = vadd.f32 %v766, 1.4214138
      %v799 = vadd.f32 %v767, 1.4214138
      %v800 = vadd.f32 %v768, 1.4214138
      %v801 = vadd.f32 %v769, 1.4214138
      %v802 = vadd.f32 %v770, 1.4214138
      %v803 = vadd.f32 %v771, 1.4214138
      %v804 = vadd.f32 %v772, 1.4214138
      %v805 = vadd.f32 %v773, 1.4214138
      %v806 = vadd.f32 %v774, 1.4214138
      %v807 = vadd.f32 %v775, 1.4214138
      %v808 = vadd.f32 %v776, 1.4214138
      %v809 = vadd.f32 %v777, 1.4214138
      %v810 = vadd.f32 %v778, 1.4214138
      %v811 = vadd.f32 %v779, 1.4214138
      %v812 = vadd.f32 %v780, 1.4214138
      %v813 = vadd.f32 %v781, 1.4214138
      %v814 = vadd.f32 %v782, 1.4214138
      %v815 = vadd.f32 %v783, 1.4214138
      %v816 = vadd.f32 %v784, 1.4214138
      %v817 = vadd.f32 %v785, 1.4214138
      %v818 = vadd.f32 %v786, 1.4214138
      %v819 = vadd.f32 %v787, 1.4214138
      %v820 = vadd.f32 %v788, 1.4214138
      %v821 = vadd.f32 %v789, 1.4214138
      %v822 = vadd.f32 %v790, 1.4214138
      %v823 = vadd.f32 %v791, 1.4214138
      %v824 = vadd.f32 %v792, 1.4214138
      %v825 = vadd.f32 %v793, 1.4214138
      %v826 = vmul.f32 %v794, %v666
      %v827 = vmul.f32 %v795, %v667
      %v828 = vmul.f32 %v796, %v668
      %v829 = vmul.f32 %v797, %v669
      %v830 = vmul.f32 %v798, %v670
      %v831 = vmul.f32 %v799, %v671
      %v832 = vmul.f32 %v800, %v672
      %v833 = vmul.f32 %v801, %v673
      %v834 = vmul.f32 %v802, %v674
      %v835 = vmul.f32 %v803, %v675
      %v836 = vmul.f32 %v804, %v676
      %v837 = vmul.f32 %v805, %v677
      %v838 = vmul.f32 %v806, %v678
      %v839 = vmul.f32 %v807, %v679
      %v840 = vmul.f32 %v808, %v680
      %v841 = vmul.f32 %v809, %v681
      %v842 = vmul.f32 %v810, %v682
      %v843 = vmul.f32 %v811, %v683
      %v844 = vmul.f32 %v812, %v684
      %v845 = vmul.f32 %v813, %v685
      %v846 = vmul.f32 %v814, %v686
      %v847 = vmul.f32 %v815, %v687
      %v848 = vmul.f32 %v816, %v688
      %v849 = vmul.f32 %v817, %v689
      %v850 = vmul.f32 %v818, %v690
      %v851 = vmul.f32 %v819, %v691
      %v852 = vmul.f32 %v820, %v692
      %v853 = vmul.f32 %v821, %v693
      %v854 = vmul.f32 %v822, %v694
      %v855 = vmul.f32 %v823, %v695
      %v856 = vmul.f32 %v824, %v696
      %v857 = vmul.f32 %v825, %v697
      %v858 = vadd.f32 %v826, -0.28449672
      %v859 = vadd.f32 %v827, -0.28449672
      %v860 = vadd.f32 %v828, -0.28449672
      %v861 = vadd.f32 %v829, -0.28449672
      %v862 = vadd.f32 %v830, -0.28449672
      %v863 = vadd.f32 %v831, -0.28449672
      %v864 = vadd.f32 %v832, -0.28449672
      %v865 = vadd.f32 %v833, -0.28449672
      %v866 = vadd.f32 %v834, -0.28449672
      %v867 = vadd.f32 %v835, -0.28449672
      %v868 = vadd.f32 %v836, -0.28449672
      %v869 = vadd.f32 %v837, -0.28449672
      %v870 = vadd.f32 %v838, -0.28449672
      %v871 = vadd.f32 %v839, -0.28449672
      %v872 = vadd.f32 %v840, -0.28449672
      %v873 = vadd.f32 %v841, -0.28449672
      %v874 = vadd.f32 %v842, -0.28449672
      %v875 = vadd.f32 %v843, -0.28449672
      %v876 = vadd.f32 %v844, -0.28449672
      %v877 = vadd.f32 %v845, -0.28449672
      %v878 = vadd.f32 %v846, -0.28449672
      %v879 = vadd.f32 %v847, -0.28449672
      %v880 = vadd.f32 %v848, -0.28449672
      %v881 = vadd.f32 %v849, -0.28449672
      %v882 = vadd.f32 %v850, -0.28449672
      %v883 = vadd.f32 %v851, -0.28449672
      %v884 = vadd.f32 %v852, -0.28449672
      %v885 = vadd.f32 %v853, -0.28449672
      %v886 = vadd.f32 %v854, -0.28449672
      %v887 = vadd.f32 %v855, -0.28449672
      %v888 = vadd.f32 %v856, -0.28449672
      %v889 = vadd.f32 %v857, -0.28449672
      %v890 = vmul.f32 %v858, %v666
      %v891 = vmul.f32 %v859, %v667
      %v892 = vmul.f32 %v860, %v668
      %v893 = vmul.f32 %v861, %v669
      %v894 = vmul.f32 %v862, %v670
      %v895 = vmul.f32 %v863, %v671
      %v896 = vmul.f32 %v864, %v672
      %v897 = vmul.f32 %v865, %v673
      %v898 = vmul.f32 %v866, %v674
      %v899 = vmul.f32 %v867, %v675
      %v900 = vmul.f32 %v868, %v676
      %v901 = vmul.f32 %v869, %v677
      %v902 = vmul.f32 %v870, %v678
      %v903 = vmul.f32 %v871, %v679
      %v904 = vmul.f32 %v872, %v680
      %v905 = vmul.f32 %v873, %v681
      %v906 = vmul.f32 %v874, %v682
      %v907 = vmul.f32 %v875, %v683
      %v908 = vmul.f32 %v876, %v684
      %v909 = vmul.f32 %v877, %v685
      %v910 = vmul.f32 %v878, %v686
      %v911 = vmul.f32 %v879, %v687
      %v912 = vmul.f32 %v880, %v688
      %v913 = vmul.f32 %v881, %v689
      %v914 = vmul.f32 %v882, %v690
      %v915 = vmul.f32 %v883, %v691
      %v916 = vmul.f32 %v884, %v692
      %v917 = vmul.f32 %v885, %v693
      %v918 = vmul.f32 %v886, %v694
      %v919 = vmul.f32 %v887, %v695
      %v920 = vmul.f32 %v888, %v696
      %v921 = vmul.f32 %v889, %v697
      %v922 = vadd.f32 %v890, 0.2548296
      %v923 = vadd.f32 %v891, 0.2548296
      %v924 = vadd.f32 %v892, 0.2548296
      %v925 = vadd.f32 %v893, 0.2548296
      %v926 = vadd.f32 %v894, 0.2548296
      %v927 = vadd.f32 %v895, 0.2548296
      %v928 = vadd.f32 %v896, 0.2548296
      %v929 = vadd.f32 %v897, 0.2548296
      %v930 = vadd.f32 %v898, 0.2548296
      %v931 = vadd.f32 %v899, 0.2548296
      %v932 = vadd.f32 %v900, 0.2548296
      %v933 = vadd.f32 %v901, 0.2548296
      %v934 = vadd.f32 %v902, 0.2548296
      %v935 = vadd.f32 %v903, 0.2548296
      %v936 = vadd.f32 %v904, 0.2548296
      %v937 = vadd.f32 %v905, 0.2548296
      %v938 = vadd.f32 %v906, 0.2548296
      %v939 = vadd.f32 %v907, 0.2548296
      %v940 = vadd.f32 %v908, 0.2548296
      %v941 = vadd.f32 %v909, 0.2548296
      %v942 = vadd.f32 %v910, 0.2548296
      %v943 = vadd.f32 %v911, 0.2548296
      %v944 = vadd.f32 %v912, 0.2548296
      %v945 = vadd.f32 %v913, 0.2548296
      %v946 = vadd.f32 %v914, 0.2548296
      %v947 = vadd.f32 %v915, 0.2548296
      %v948 = vadd.f32 %v916, 0.2548296
      %v949 = vadd.f32 %v917, 0.2548296
      %v950 = vadd.f32 %v918, 0.2548296
      %v951 = vadd.f32 %v919, 0.2548296
      %v952 = vadd.f32 %v920, 0.2548296
      %v953 = vadd.f32 %v921, 0.2548296
      %v954 = vmul.f32 %v922, %v666
      %v955 = vmul.f32 %v923, %v667
      %v956 = vmul.f32 %v924, %v668
      %v957 = vmul.f32 %v925, %v669
      %v958 = vmul.f32 %v926, %v670
      %v959 = vmul.f32 %v927, %v671
      %v960 = vmul.f32 %v928, %v672
      %v961 = vmul.f32 %v929, %v673
      %v962 = vmul.f32 %v930, %v674
      %v963 = vmul.f32 %v931, %v675
      %v964 = vmul.f32 %v932, %v676
      %v965 = vmul.f32 %v933, %v677
      %v966 = vmul.f32 %v934, %v678
      %v967 = vmul.f32 %v935, %v679
      %v968 = vmul.f32 %v936, %v680
      %v969 = vmul.f32 %v937, %v681
      %v970 = vmul.f32 %v938, %v682
      %v971 = vmul.f32 %v939, %v683
      %v972 = vmul.f32 %v940, %v684
      %v973 = vmul.f32 %v941, %v685
      %v974 = vmul.f32 %v942, %v686
      %v975 = vmul.f32 %v943, %v687
      %v976 = vmul.f32 %v944, %v688
      %v977 = vmul.f32 %v945, %v689
      %v978 = vmul.f32 %v946, %v690
      %v979 = vmul.f32 %v947, %v691
      %v980 = vmul.f32 %v948, %v692
      %v981 = vmul.f32 %v949, %v693
      %v982 = vmul.f32 %v950, %v694
      %v983 = vmul.f32 %v951, %v695
      %v984 = vmul.f32 %v952, %v696
      %v985 = vmul.f32 %v953, %v697
      %v986 = vmul.f32 %v954, 0.5
      %v987 = vmul.f32 %v955, 0.5
      %v988 = vmul.f32 %v956, 0.5
      %v989 = vmul.f32 %v957, 0.5
      %v990 = vmul.f32 %v958, 0.5
      %v991 = vmul.f32 %v959, 0.5
      %v992 = vmul.f32 %v960, 0.5
      %v993 = vmul.f32 %v961, 0.5
      %v994 = vmul.f32 %v962, 0.5
      %v995 = vmul.f32 %v963, 0.5
      %v996 = vmul.f32 %v964, 0.5
      %v997 = vmul.f32 %v965, 0.5
      %v998 = vmul.f32 %v966, 0.5
      %v999 = vmul.f32 %v967, 0.5
      %v1000 = vmul.f32 %v968, 0.5
      %v1001 = vmul.f32 %v969, 0.5
      %v1002 = vmul.f32 %v970, 0.5
      %v1003 = vmul.f32 %v971, 0.5
      %v1004 = vmul.f32 %v972, 0.5
      %v1005 = vmul.f32 %v973, 0.5
      %v1006 = vmul.f32 %v974, 0.5
      %v1007 = vmul.f32 %v975, 0.5
      %v1008 = vmul.f32 %v976, 0.5
      %v1009 = vmul.f32 %v977, 0.5
      %v1010 = vmul.f32 %v978, 0.5
      %v1011 = vmul.f32 %v979, 0.5
      %v1012 = vmul.f32 %v980, 0.5
      %v1013 = vmul.f32 %v981, 0.5
      %v1014 = vmul.f32 %v982, 0.5
      %v1015 = vmul.f32 %v983, 0.5
      %v1016 = vmul.f32 %v984, 0.5
      %v1017 = vmul.f32 %v985, 0.5
      %v1018 = vsub.f32 0.0, %v570
      %v1019 = vsub.f32 0.0, %v571
      %v1020 = vsub.f32 0.0, %v572
      %v1021 = vsub.f32 0.0, %v573
      %v1022 = vsub.f32 0.0, %v574
      %v1023 = vsub.f32 0.0, %v575
      %v1024 = vsub.f32 0.0, %v576
      %v1025 = vsub.f32 0.0, %v577
      %v1026 = vsub.f32 0.0, %v578
      %v1027 = vsub.f32 0.0, %v579
      %v1028 = vsub.f32 0.0, %v580
      %v1029 = vsub.f32 0.0, %v581
      %v1030 = vsub.f32 0.0, %v582
      %v1031 = vsub.f32 0.0, %v583
      %v1032 = vsub.f32 0.0, %v584
      %v1033 = vsub.f32 0.0, %v585
      %v1034 = vsub.f32 0.0, %v586
      %v1035 = vsub.f32 0.0, %v587
      %v1036 = vsub.f32 0.0, %v588
      %v1037 = vsub.f32 0.0, %v589
      %v1038 = vsub.f32 0.0, %v590
      %v1039 = vsub.f32 0.0, %v591
      %v1040 = vsub.f32 0.0, %v592
      %v1041 = vsub.f32 0.0, %v593
      %v1042 = vsub.f32 0.0, %v594
      %v1043 = vsub.f32 0.0, %v595
      %v1044 = vsub.f32 0.0, %v596
      %v1045 = vsub.f32 0.0, %v597
      %v1046 = vsub.f32 0.0, %v598
      %v1047 = vsub.f32 0.0, %v599
      %v1048 = vsub.f32 0.0, %v600
      %v1049 = vsub.f32 0.0, %v601
      %v1050 = vmul.f32 %v1018, %v570
      %v1051 = vmul.f32 %v1019, %v571
      %v1052 = vmul.f32 %v1020, %v572
      %v1053 = vmul.f32 %v1021, %v573
      %v1054 = vmul.f32 %v1022, %v574
      %v1055 = vmul.f32 %v1023, %v575
      %v1056 = vmul.f32 %v1024, %v576
      %v1057 = vmul.f32 %v1025, %v577
      %v1058 = vmul.f32 %v1026, %v578
      %v1059 = vmul.f32 %v1027, %v579
      %v1060 = vmul.f32 %v1028, %v580
      %v1061 = vmul.f32 %v1029, %v581
      %v1062 = vmul.f32 %v1030, %v582
      %v1063 = vmul.f32 %v1031, %v583
      %v1064 = vmul.f32 %v1032, %v584
      %v1065 = vmul.f32 %v1033, %v585
      %v1066 = vmul.f32 %v1034, %v586
      %v1067 = vmul.f32 %v1035, %v587
      %v1068 = vmul.f32 %v1036, %v588
      %v1069 = vmul.f32 %v1037, %v589
      %v1070 = vmul.f32 %v1038, %v590
      %v1071 = vmul.f32 %v1039, %v591
      %v1072 = vmul.f32 %v1040, %v592
      %v1073 = vmul.f32 %v1041, %v593
      %v1074 = vmul.f32 %v1042, %v594
      %v1075 = vmul.f32 %v1043, %v595
      %v1076 = vmul.f32 %v1044, %v596
      %v1077 = vmul.f32 %v1045, %v597
      %v1078 = vmul.f32 %v1046, %v598
      %v1079 = vmul.f32 %v1047, %v599
      %v1080 = vmul.f32 %v1048, %v600
      %v1081 = vmul.f32 %v1049, %v601
      %v1082 = vmul.f32 %v1050, 1.442695
      %v1083 = vpow.pop %v1082
      %v1084 = vmul.f32 %v1051, 1.442695
      %v1085 = vpow.pop %v1084
      %v1086 = vmul.f32 %v1052, 1.442695
      %v1087 = vpow.pop %v1086
      %v1088 = vmul.f32 %v1053, 1.442695
      %v1089 = vpow.pop %v1088
      %v1090 = vmul.f32 %v1054, 1.442695
      %v1091 = vpow.pop %v1090
      %v1092 = vmul.f32 %v1055, 1.442695
      %v1093 = vpow.pop %v1092
      %v1094 = vmul.f32 %v1056, 1.442695
      %v1095 = vpow.pop %v1094
      %v1096 = vmul.f32 %v1057, 1.442695
      %v1097 = vpow.pop %v1096
      %v1098 = vmul.f32 %v1058, 1.442695
      %v1099 = vpow.pop %v1098
      %v1100 = vmul.f32 %v1059, 1.442695
      %v1101 = vpow.pop %v1100
      %v1102 = vmul.f32 %v1060, 1.442695
      %v1103 = vpow.pop %v1102
      %v1104 = vmul.f32 %v1061, 1.442695
      %v1105 = vpow.pop %v1104
      %v1106 = vmul.f32 %v1062, 1.442695
      %v1107 = vpow.pop %v1106
      %v1108 = vmul.f32 %v1063, 1.442695
      %v1109 = vpow.pop %v1108
      %v1110 = vmul.f32 %v1064, 1.442695
      %v1111 = vpow.pop %v1110
      %v1112 = vmul.f32 %v1065, 1.442695
      %v1113 = vpow.pop %v1112
      %v1114 = vmul.f32 %v1066, 1.442695
      %v1115 = vpow.pop %v1114
      %v1116 = vmul.f32 %v1067, 1.442695
      %v1117 = vpow.pop %v1116
      %v1118 = vmul.f32 %v1068, 1.442695
      %v1119 = vpow.pop %v1118
      %v1120 = vmul.f32 %v1069, 1.442695
      %v1121 = vpow.pop %v1120
      %v1122 = vmul.f32 %v1070, 1.442695
      %v1123 = vpow.pop %v1122
      %v1124 = vmul.f32 %v1071, 1.442695
      %v1125 = vpow.pop %v1124
      %v1126 = vmul.f32 %v1072, 1.442695
      %v1127 = vpow.pop %v1126
      %v1128 = vmul.f32 %v1073, 1.442695
      %v1129 = vpow.pop %v1128
      %v1130 = vmul.f32 %v1074, 1.442695
      %v1131 = vpow.pop %v1130
      %v1132 = vmul.f32 %v1075, 1.442695
      %v1133 = vpow.pop %v1132
      %v1134 = vmul.f32 %v1076, 1.442695
      %v1135 = vpow.pop %v1134
      %v1136 = vmul.f32 %v1077, 1.442695
      %v1137 = vpow.pop %v1136
      %v1138 = vmul.f32 %v1078, 1.442695
      %v1139 = vpow.pop %v1138
      %v1140 = vmul.f32 %v1079, 1.442695
      %v1141 = vpow.pop %v1140
      %v1142 = vmul.f32 %v1080, 1.442695
      %v1143 = vpow.pop %v1142
      %v1144 = vmul.f32 %v1081, 1.442695
      %v1145 = vpow.pop %v1144
      %v1146 = vmul.f32 %v986, %v1083
      %v1147 = vmul.f32 %v987, %v1085
      %v1148 = vmul.f32 %v988, %v1087
      %v1149 = vmul.f32 %v989, %v1089
      %v1150 = vmul.f32 %v990, %v1091
      %v1151 = vmul.f32 %v991, %v1093
      %v1152 = vmul.f32 %v992, %v1095
      %v1153 = vmul.f32 %v993, %v1097
      %v1154 = vmul.f32 %v994, %v1099
      %v1155 = vmul.f32 %v995, %v1101
      %v1156 = vmul.f32 %v996, %v1103
      %v1157 = vmul.f32 %v997, %v1105
      %v1158 = vmul.f32 %v998, %v1107
      %v1159 = vmul.f32 %v999, %v1109
      %v1160 = vmul.f32 %v1000, %v1111
      %v1161 = vmul.f32 %v1001, %v1113
      %v1162 = vmul.f32 %v1002, %v1115
      %v1163 = vmul.f32 %v1003, %v1117
      %v1164 = vmul.f32 %v1004, %v1119
      %v1165 = vmul.f32 %v1005, %v1121
      %v1166 = vmul.f32 %v1006, %v1123
      %v1167 = vmul.f32 %v1007, %v1125
      %v1168 = vmul.f32 %v1008, %v1127
      %v1169 = vmul.f32 %v1009, %v1129
      %v1170 = vmul.f32 %v1010, %v1131
      %v1171 = vmul.f32 %v1011, %v1133
      %v1172 = vmul.f32 %v1012, %v1135
      %v1173 = vmul.f32 %v1013, %v1137
      %v1174 = vmul.f32 %v1014, %v1139
      %v1175 = vmul.f32 %v1015, %v1141
      %v1176 = vmul.f32 %v1016, %v1143
      %v1177 = vmul.f32 %v1017, %v1145
      %vm1178 = vcmp.ge.f32.partialorder %v426, 0.0
      %vm1179 = vcmp.ge.f32.partialorder %v491, 0.0
      %vm1180 = vcmp.ge.f32.partialorder %v429, 0.0
      %vm1181 = vcmp.ge.f32.partialorder %v494, 0.0
      %vm1182 = vcmp.ge.f32.partialorder %v432, 0.0
      %vm1183 = vcmp.ge.f32.partialorder %v497, 0.0
      %vm1184 = vcmp.ge.f32.partialorder %v435, 0.0
      %vm1185 = vcmp.ge.f32.partialorder %v500, 0.0
      %vm1186 = vcmp.ge.f32.partialorder %v438, 0.0
      %vm1187 = vcmp.ge.f32.partialorder %v503, 0.0
      %vm1188 = vcmp.ge.f32.partialorder %v441, 0.0
      %vm1189 = vcmp.ge.f32.partialorder %v506, 0.0
      %vm1190 = vcmp.ge.f32.partialorder %v444, 0.0
      %vm1191 = vcmp.ge.f32.partialorder %v509, 0.0
      %vm1192 = vcmp.ge.f32.partialorder %v447, 0.0
      %vm1193 = vcmp.ge.f32.partialorder %v512, 0.0
      %vm1194 = vcmp.ge.f32.partialorder %v450, 0.0
      %vm1195 = vcmp.ge.f32.partialorder %v515, 0.0
      %vm1196 = vcmp.ge.f32.partialorder %v453, 0.0
      %vm1197 = vcmp.ge.f32.partialorder %v518, 0.0
      %vm1198 = vcmp.ge.f32.partialorder %v456, 0.0
      %vm1199 = vcmp.ge.f32.partialorder %v521, 0.0
      %vm1200 = vcmp.ge.f32.partialorder %v459, 0.0
      %vm1201 = vcmp.ge.f32.partialorder %v524, 0.0
      %vm1202 = vcmp.ge.f32.partialorder %v462, 0.0
      %vm1203 = vcmp.ge.f32.partialorder %v527, 0.0
      %vm1204 = vcmp.ge.f32.partialorder %v465, 0.0
      %vm1205 = vcmp.ge.f32.partialorder %v530, 0.0
      %vm1206 = vcmp.ge.f32.partialorder %v468, 0.0
      %vm1207 = vcmp.ge.f32.partialorder %v533, 0.0
      %vm1208 = vcmp.ge.f32.partialorder %v471, 0.0
      %vm1209 = vcmp.ge.f32.partialorder %v536, 0.0
      %v1210 = vsub.f32 1.0, %v1146
      %v1211 = vsub.f32 1.0, %v1147
      %v1212 = vsub.f32 1.0, %v1148
      %v1213 = vsub.f32 1.0, %v1149
      %v1214 = vsub.f32 1.0, %v1150
      %v1215 = vsub.f32 1.0, %v1151
      %v1216 = vsub.f32 1.0, %v1152
      %v1217 = vsub.f32 1.0, %v1153
      %v1218 = vsub.f32 1.0, %v1154
      %v1219 = vsub.f32 1.0, %v1155
      %v1220 = vsub.f32 1.0, %v1156
      %v1221 = vsub.f32 1.0, %v1157
      %v1222 = vsub.f32 1.0, %v1158
      %v1223 = vsub.f32 1.0, %v1159
      %v1224 = vsub.f32 1.0, %v1160
      %v1225 = vsub.f32 1.0, %v1161
      %v1226 = vsub.f32 1.0, %v1162
      %v1227 = vsub.f32 1.0, %v1163
      %v1228 = vsub.f32 1.0, %v1164
      %v1229 = vsub.f32 1.0, %v1165
      %v1230 = vsub.f32 1.0, %v1166
      %v1231 = vsub.f32 1.0, %v1167
      %v1232 = vsub.f32 1.0, %v1168
      %v1233 = vsub.f32 1.0, %v1169
      %v1234 = vsub.f32 1.0, %v1170
      %v1235 = vsub.f32 1.0, %v1171
      %v1236 = vsub.f32 1.0, %v1172
      %v1237 = vsub.f32 1.0, %v1173
      %v1238 = vsub.f32 1.0, %v1174
      %v1239 = vsub.f32 1.0, %v1175
      %v1240 = vsub.f32 1.0, %v1176
      %v1241 = vsub.f32 1.0, %v1177
      %v1242 = vsel %vm1178, %v1210, %v1146
      %v1243 = vsel %vm1179, %v1211, %v1147
      %v1244 = vsel %vm1180, %v1212, %v1148
      %v1245 = vsel %vm1181, %v1213, %v1149
      %v1246 = vsel %vm1182, %v1214, %v1150
      %v1247 = vsel %vm1183, %v1215, %v1151
      %v1248 = vsel %vm1184, %v1216, %v1152
      %v1249 = vsel %vm1185, %v1217, %v1153
      %v1250 = vsel %vm1186, %v1218, %v1154
      %v1251 = vsel %vm1187, %v1219, %v1155
      %v1252 = vsel %vm1188, %v1220, %v1156
      %v1253 = vsel %vm1189, %v1221, %v1157
      %v1254 = vsel %vm1190, %v1222, %v1158
      %v1255 = vsel %vm1191, %v1223, %v1159
      %v1256 = vsel %vm1192, %v1224, %v1160
      %v1257 = vsel %vm1193, %v1225, %v1161
      %v1258 = vsel %vm1194, %v1226, %v1162
      %v1259 = vsel %vm1195, %v1227, %v1163
      %v1260 = vsel %vm1196, %v1228, %v1164
      %v1261 = vsel %vm1197, %v1229, %v1165
      %v1262 = vsel %vm1198, %v1230, %v1166
      %v1263 = vsel %vm1199, %v1231, %v1167
      %v1264 = vsel %vm1200, %v1232, %v1168
      %v1265 = vsel %vm1201, %v1233, %v1169
      %v1266 = vsel %vm1202, %v1234, %v1170
      %v1267 = vsel %vm1203, %v1235, %v1171
      %v1268 = vsel %vm1204, %v1236, %v1172
      %v1269 = vsel %vm1205, %v1237, %v1173
      %v1270 = vsel %vm1206, %v1238, %v1174
      %v1271 = vsel %vm1207, %v1239, %v1175
      %v1272 = vsel %vm1208, %v1240, %v1176
      %v1273 = vsel %vm1209, %v1241, %v1177
      %v1274 = vmul.f32 %v426, %v1242
      %v1275 = vmul.f32 %v491, %v1243
      %v1276 = vmul.f32 %v429, %v1244
      %v1277 = vmul.f32 %v494, %v1245
      %v1278 = vmul.f32 %v432, %v1246
      %v1279 = vmul.f32 %v497, %v1247
      %v1280 = vmul.f32 %v435, %v1248
      %v1281 = vmul.f32 %v500, %v1249
      %v1282 = vmul.f32 %v438, %v1250
      %v1283 = vmul.f32 %v503, %v1251
      %v1284 = vmul.f32 %v441, %v1252
      %v1285 = vmul.f32 %v506, %v1253
      %v1286 = vmul.f32 %v444, %v1254
      %v1287 = vmul.f32 %v509, %v1255
      %v1288 = vmul.f32 %v447, %v1256
      %v1289 = vmul.f32 %v512, %v1257
      %v1290 = vmul.f32 %v450, %v1258
      %v1291 = vmul.f32 %v515, %v1259
      %v1292 = vmul.f32 %v453, %v1260
      %v1293 = vmul.f32 %v518, %v1261
      %v1294 = vmul.f32 %v456, %v1262
      %v1295 = vmul.f32 %v521, %v1263
      %v1296 = vmul.f32 %v459, %v1264
      %v1297 = vmul.f32 %v524, %v1265
      %v1298 = vmul.f32 %v462, %v1266
      %v1299 = vmul.f32 %v527, %v1267
      %v1300 = vmul.f32 %v465, %v1268
      %v1301 = vmul.f32 %v530, %v1269
      %v1302 = vmul.f32 %v468, %v1270
      %v1303 = vmul.f32 %v533, %v1271
      %v1304 = vmul.f32 %v471, %v1272
      %v1305 = vmul.f32 %v536, %v1273
      %v1306 = vld [vmem:[%s3] sm:$0xff]
      %v1307 = vld [vmem:[%s3 + $0x8] sm:$0xff]
      %v1308 = vld [vmem:[%s3 + $0x10] sm:$0xff]
      %v1309 = vld [vmem:[%s3 + $0x18] sm:$0xff]
      %v1310 = vld [vmem:[%s3 + $0x20] sm:$0xff]
      %v1311 = vld [vmem:[%s3 + $0x28] sm:$0xff]
      %v1312 = vld [vmem:[%s3 + $0x30] sm:$0xff]
      %v1313 = vld [vmem:[%s3 + $0x38] sm:$0xff]
      %v1314 = vld [vmem:[%s3 + $0x40] sm:$0xff]
      %v1315 = vld [vmem:[%s3 + $0x48] sm:$0xff]
      %v1316 = vld [vmem:[%s3 + $0x50] sm:$0xff]
      %v1317 = vld [vmem:[%s3 + $0x58] sm:$0xff]
      %v1318 = vld [vmem:[%s3 + $0x60] sm:$0xff]
      %v1319 = vld [vmem:[%s3 + $0x68] sm:$0xff]
      %v1320 = vld [vmem:[%s3 + $0x70] sm:$0xff]
      %v1321 = vld [vmem:[%s3 + $0x78] sm:$0xff]
      %v1322 = vld [vmem:[%s4] sm:$0xff]
      %v1323 = vld [vmem:[%s4 + $0x8] sm:$0xff]
      %v1324 = vld [vmem:[%s4 + $0x10] sm:$0xff]
      %v1325 = vld [vmem:[%s4 + $0x18] sm:$0xff]
      %v1326 = vld [vmem:[%s4 + $0x20] sm:$0xff]
      %v1327 = vld [vmem:[%s4 + $0x28] sm:$0xff]
      %v1328 = vld [vmem:[%s4 + $0x30] sm:$0xff]
      %v1329 = vld [vmem:[%s4 + $0x38] sm:$0xff]
      %v1330 = vld [vmem:[%s4 + $0x40] sm:$0xff]
      %v1331 = vld [vmem:[%s4 + $0x48] sm:$0xff]
      %v1332 = vld [vmem:[%s4 + $0x50] sm:$0xff]
      %v1333 = vld [vmem:[%s4 + $0x58] sm:$0xff]
      %v1334 = vld [vmem:[%s4 + $0x60] sm:$0xff]
      %v1335 = vld [vmem:[%s4 + $0x68] sm:$0xff]
      %v1336 = vld [vmem:[%s4 + $0x70] sm:$0xff]
      %v1337 = vld [vmem:[%s4 + $0x78] sm:$0xff]
      %1339 = vset.pattern.permute.xlu0 0
      %1340 = vperm.xlu0 %1339, %v1322
      %v1341 = vpop.permute.xlu0 %1340
      %1344 = vset.pattern.permute.xlu0 0
      %1345 = vperm.xlu0 %1344, %v1323
      %v1346 = vpop.permute.xlu0 %1345
      %1349 = vset.pattern.permute.xlu0 0
      %1350 = vperm.xlu0 %1349, %v1324
      %v1351 = vpop.permute.xlu0 %1350
      %1354 = vset.pattern.permute.xlu0 0
      %1355 = vperm.xlu0 %1354, %v1325
      %v1356 = vpop.permute.xlu0 %1355
      %1359 = vset.pattern.permute.xlu0 0
      %1360 = vperm.xlu0 %1359, %v1326
      %v1361 = vpop.permute.xlu0 %1360
      %1364 = vset.pattern.permute.xlu0 0
      %1365 = vperm.xlu0 %1364, %v1327
      %v1366 = vpop.permute.xlu0 %1365
      %1369 = vset.pattern.permute.xlu0 0
      %1370 = vperm.xlu0 %1369, %v1328
      %v1371 = vpop.permute.xlu0 %1370
      %1374 = vset.pattern.permute.xlu0 0
      %1375 = vperm.xlu0 %1374, %v1329
      %v1376 = vpop.permute.xlu0 %1375
      %1379 = vset.pattern.permute.xlu0 0
      %1380 = vperm.xlu0 %1379, %v1330
      %v1381 = vpop.permute.xlu0 %1380
      %1384 = vset.pattern.permute.xlu0 0
      %1385 = vperm.xlu0 %1384, %v1331
      %v1386 = vpop.permute.xlu0 %1385
      %1389 = vset.pattern.permute.xlu0 0
      %1390 = vperm.xlu0 %1389, %v1332
      %v1391 = vpop.permute.xlu0 %1390
      %1394 = vset.pattern.permute.xlu0 0
      %1395 = vperm.xlu0 %1394, %v1333
      %v1396 = vpop.permute.xlu0 %1395
      %1399 = vset.pattern.permute.xlu0 0
      %1400 = vperm.xlu0 %1399, %v1334
      %v1401 = vpop.permute.xlu0 %1400
      %1404 = vset.pattern.permute.xlu0 0
      %1405 = vperm.xlu0 %1404, %v1335
      %v1406 = vpop.permute.xlu0 %1405
      %1409 = vset.pattern.permute.xlu0 0
      %1410 = vperm.xlu0 %1409, %v1336
      %v1411 = vpop.permute.xlu0 %1410
      %1414 = vset.pattern.permute.xlu0 0
      %1415 = vperm.xlu0 %1414, %v1337
      %v1416 = vpop.permute.xlu0 %1415
      %1418 = vmatpush.msra.mxu0 %v1304
      %1419 = vmatpush.msra.mxu0 %v1302
      %1420 = vmatpush.msra.mxu0 %v1300
      %1421 = vmatpush.msra.mxu0 %v1298
      %1422 = vmatpush.msra.mxu0 %v1296
      %1423 = vmatpush.msra.mxu0 %v1294
      %1424 = vmatpush.msra.mxu0 %v1292
      %1425 = vmatpush.msra.mxu0 %v1290
      %1426 = vmatpush.msra.mxu0 %v1288
      %1427 = vmatpush.msra.mxu0 %v1286
      %1428 = vmatpush.msra.mxu0 %v1284
      %1429 = vmatpush.msra.mxu0 %v1282
      %1430 = vmatpush.msra.mxu0 %v1280
      %1431 = vmatpush.msra.mxu0 %v1278
      %1432 = vmatpush.msra.mxu0 %v1276
      %1433 = vmatpush.msra.mxu0 %v1274
      %1434 = vmatmul.f32.gmra.mxu0 %v1306
      %v1435 = vpop.f32.mrf.mxu0
      %v1436 = vadd.f32 %v1341, %v1435
      %1437 = vmatmul.f32.gmra.mxu0 %v1307
      %v1438 = vpop.f32.mrf.mxu0
      %v1439 = vadd.f32 %v1346, %v1438
      %1440 = vmatmul.f32.gmra.mxu0 %v1308
      %v1441 = vpop.f32.mrf.mxu0
      %v1442 = vadd.f32 %v1351, %v1441
      %1443 = vmatmul.f32.gmra.mxu0 %v1309
      %v1444 = vpop.f32.mrf.mxu0
      %v1445 = vadd.f32 %v1356, %v1444
      %1446 = vmatmul.f32.gmra.mxu0 %v1310
      %v1447 = vpop.f32.mrf.mxu0
      %v1448 = vadd.f32 %v1361, %v1447
      %1449 = vmatmul.f32.gmra.mxu0 %v1311
      %v1450 = vpop.f32.mrf.mxu0
      %v1451 = vadd.f32 %v1366, %v1450
      %1452 = vmatmul.f32.gmra.mxu0 %v1312
      %v1453 = vpop.f32.mrf.mxu0
      %v1454 = vadd.f32 %v1371, %v1453
      %1455 = vmatmul.f32.gmra.mxu0 %v1313
      %v1456 = vpop.f32.mrf.mxu0
      %v1457 = vadd.f32 %v1376, %v1456
      %1458 = vmatmul.f32.gmra.mxu0 %v1314
      %v1459 = vpop.f32.mrf.mxu0
      %v1460 = vadd.f32 %v1381, %v1459
      %1461 = vmatmul.f32.gmra.mxu0 %v1315
      %v1462 = vpop.f32.mrf.mxu0
      %v1463 = vadd.f32 %v1386, %v1462
      %1464 = vmatmul.f32.gmra.mxu0 %v1316
      %v1465 = vpop.f32.mrf.mxu0
      %v1466 = vadd.f32 %v1391, %v1465
      %1467 = vmatmul.f32.gmra.mxu0 %v1317
      %v1468 = vpop.f32.mrf.mxu0
      %v1469 = vadd.f32 %v1396, %v1468
      %1470 = vmatmul.f32.gmra.mxu0 %v1318
      %v1471 = vpop.f32.mrf.mxu0
      %v1472 = vadd.f32 %v1401, %v1471
      %1473 = vmatmul.f32.gmra.mxu0 %v1319
      %v1474 = vpop.f32.mrf.mxu0
      %v1475 = vadd.f32 %v1406, %v1474
      %1476 = vmatmul.f32.gmra.mxu0 %v1320
      %v1477 = vpop.f32.mrf.mxu0
      %v1478 = vadd.f32 %v1411, %v1477
      %1479 = vmatmul.f32.gmra.mxu0 %v1321
      %v1480 = vpop.f32.mrf.mxu0
      %v1481 = vadd.f32 %v1416, %v1480
      %1482 = vdwg.mxu0
      %1483 = vmatpush.msra.mxu0 %v1305
      %1484 = vmatpush.msra.mxu0 %v1303
      %1485 = vmatpush.msra.mxu0 %v1301
      %1486 = vmatpush.msra.mxu0 %v1299
      %1487 = vmatpush.msra.mxu0 %v1297
      %1488 = vmatpush.msra.mxu0 %v1295
      %1489 = vmatpush.msra.mxu0 %v1293
      %1490 = vmatpush.msra.mxu0 %v1291
      %1491 = vmatpush.msra.mxu0 %v1289
      %1492 = vmatpush.msra.mxu0 %v1287
      %1493 = vmatpush.msra.mxu0 %v1285
      %1494 = vmatpush.msra.mxu0 %v1283
      %1495 = vmatpush.msra.mxu0 %v1281
      %1496 = vmatpush.msra.mxu0 %v1279
      %1497 = vmatpush.msra.mxu0 %v1277
      %1498 = vmatpush.msra.mxu0 %v1275
      %1499 = vmatmul.f32.gmra.mxu0 %v1306
      %v1500 = vpop.f32.mrf.mxu0
      %v1501 = vadd.f32 %v1341, %v1500
      %1502 = vmatmul.f32.gmra.mxu0 %v1307
      %v1503 = vpop.f32.mrf.mxu0
      %v1504 = vadd.f32 %v1346, %v1503
      %1505 = vmatmul.f32.gmra.mxu0 %v1308
      %v1506 = vpop.f32.mrf.mxu0
      %v1507 = vadd.f32 %v1351, %v1506
      %1508 = vmatmul.f32.gmra.mxu0 %v1309
      %v1509 = vpop.f32.mrf.mxu0
      %v1510 = vadd.f32 %v1356, %v1509
      %1511 = vmatmul.f32.gmra.mxu0 %v1310
      %v1512 = vpop.f32.mrf.mxu0
      %v1513 = vadd.f32 %v1361, %v1512
      %1514 = vmatmul.f32.gmra.mxu0 %v1311
      %v1515 = vpop.f32.mrf.mxu0
      %v1516 = vadd.f32 %v1366, %v1515
      %1517 = vmatmul.f32.gmra.mxu0 %v1312
      %v1518 = vpop.f32.mrf.mxu0
      %v1519 = vadd.f32 %v1371, %v1518
      %1520 = vmatmul.f32.gmra.mxu0 %v1313
      %v1521 = vpop.f32.mrf.mxu0
      %v1522 = vadd.f32 %v1376, %v1521
      %1523 = vmatmul.f32.gmra.mxu0 %v1314
      %v1524 = vpop.f32.mrf.mxu0
      %v1525 = vadd.f32 %v1381, %v1524
      %1526 = vmatmul.f32.gmra.mxu0 %v1315
      %v1527 = vpop.f32.mrf.mxu0
      %v1528 = vadd.f32 %v1386, %v1527
      %1529 = vmatmul.f32.gmra.mxu0 %v1316
      %v1530 = vpop.f32.mrf.mxu0
      %v1531 = vadd.f32 %v1391, %v1530
      %1532 = vmatmul.f32.gmra.mxu0 %v1317
      %v1533 = vpop.f32.mrf.mxu0
      %v1534 = vadd.f32 %v1396, %v1533
      %1535 = vmatmul.f32.gmra.mxu0 %v1318
      %v1536 = vpop.f32.mrf.mxu0
      %v1537 = vadd.f32 %v1401, %v1536
      %1538 = vmatmul.f32.gmra.mxu0 %v1319
      %v1539 = vpop.f32.mrf.mxu0
      %v1540 = vadd.f32 %v1406, %v1539
      %1541 = vmatmul.f32.gmra.mxu0 %v1320
      %v1542 = vpop.f32.mrf.mxu0
      %v1543 = vadd.f32 %v1411, %v1542
      %1544 = vmatmul.f32.gmra.mxu0 %v1321
      %v1545 = vpop.f32.mrf.mxu0
      %v1546 = vadd.f32 %v1416, %v1545
      %1547 = vdwg.mxu0
      %v1548 = vmul.f32 %v1436, 0.5
      %v1549 = vmul.f32 %v1501, 0.5
      %v1550 = vmul.f32 %v1439, 0.5
      %v1551 = vmul.f32 %v1504, 0.5
      %v1552 = vmul.f32 %v1442, 0.5
      %v1553 = vmul.f32 %v1507, 0.5
      %v1554 = vmul.f32 %v1445, 0.5
      %v1555 = vmul.f32 %v1510, 0.5
      %v1556 = vmul.f32 %v1448, 0.5
      %v1557 = vmul.f32 %v1513, 0.5
      %v1558 = vmul.f32 %v1451, 0.5
      %v1559 = vmul.f32 %v1516, 0.5
      %v1560 = vmul.f32 %v1454, 0.5
      %v1561 = vmul.f32 %v1519, 0.5
      %v1562 = vmul.f32 %v1457, 0.5
      %v1563 = vmul.f32 %v1522, 0.5
      %v1564 = vmul.f32 %v1460, 0.5
      %v1565 = vmul.f32 %v1525, 0.5
      %v1566 = vmul.f32 %v1463, 0.5
      %v1567 = vmul.f32 %v1528, 0.5
      %v1568 = vmul.f32 %v1466, 0.5
      %v1569 = vmul.f32 %v1531, 0.5
      %v1570 = vmul.f32 %v1469, 0.5
      %v1571 = vmul.f32 %v1534, 0.5
      %v1572 = vmul.f32 %v1472, 0.5
      %v1573 = vmul.f32 %v1537, 0.5
      %v1574 = vmul.f32 %v1475, 0.5
      %v1575 = vmul.f32 %v1540, 0.5
      %v1576 = vmul.f32 %v1478, 0.5
      %v1577 = vmul.f32 %v1543, 0.5
      %v1578 = vmul.f32 %v1481, 0.5
      %v1579 = vmul.f32 %v1546, 0.5
      %v1580 = vtanh.pop %v1548
      %v1581 = vtanh.pop %v1549
      %v1582 = vtanh.pop %v1550
      %v1583 = vtanh.pop %v1551
      %v1584 = vtanh.pop %v1552
      %v1585 = vtanh.pop %v1553
      %v1586 = vtanh.pop %v1554
      %v1587 = vtanh.pop %v1555
      %v1588 = vtanh.pop %v1556
      %v1589 = vtanh.pop %v1557
      %v1590 = vtanh.pop %v1558
      %v1591 = vtanh.pop %v1559
      %v1592 = vtanh.pop %v1560
      %v1593 = vtanh.pop %v1561
      %v1594 = vtanh.pop %v1562
      %v1595 = vtanh.pop %v1563
      %v1596 = vtanh.pop %v1564
      %v1597 = vtanh.pop %v1565
      %v1598 = vtanh.pop %v1566
      %v1599 = vtanh.pop %v1567
      %v1600 = vtanh.pop %v1568
      %v1601 = vtanh.pop %v1569
      %v1602 = vtanh.pop %v1570
      %v1603 = vtanh.pop %v1571
      %v1604 = vtanh.pop %v1572
      %v1605 = vtanh.pop %v1573
      %v1606 = vtanh.pop %v1574
      %v1607 = vtanh.pop %v1575
      %v1608 = vtanh.pop %v1576
      %v1609 = vtanh.pop %v1577
      %v1610 = vtanh.pop %v1578
      %v1611 = vtanh.pop %v1579
      %v1612 = vmul.f32 %v1580, 0.5
      %v1613 = vmul.f32 %v1581, 0.5
      %v1614 = vmul.f32 %v1582, 0.5
      %v1615 = vmul.f32 %v1583, 0.5
      %v1616 = vmul.f32 %v1584, 0.5
      %v1617 = vmul.f32 %v1585, 0.5
      %v1618 = vmul.f32 %v1586, 0.5
      %v1619 = vmul.f32 %v1587, 0.5
      %v1620 = vmul.f32 %v1588, 0.5
      %v1621 = vmul.f32 %v1589, 0.5
      %v1622 = vmul.f32 %v1590, 0.5
      %v1623 = vmul.f32 %v1591, 0.5
      %v1624 = vmul.f32 %v1592, 0.5
      %v1625 = vmul.f32 %v1593, 0.5
      %v1626 = vmul.f32 %v1594, 0.5
      %v1627 = vmul.f32 %v1595, 0.5
      %v1628 = vmul.f32 %v1596, 0.5
      %v1629 = vmul.f32 %v1597, 0.5
      %v1630 = vmul.f32 %v1598, 0.5
      %v1631 = vmul.f32 %v1599, 0.5
      %v1632 = vmul.f32 %v1600, 0.5
      %v1633 = vmul.f32 %v1601, 0.5
      %v1634 = vmul.f32 %v1602, 0.5
      %v1635 = vmul.f32 %v1603, 0.5
      %v1636 = vmul.f32 %v1604, 0.5
      %v1637 = vmul.f32 %v1605, 0.5
      %v1638 = vmul.f32 %v1606, 0.5
      %v1639 = vmul.f32 %v1607, 0.5
      %v1640 = vmul.f32 %v1608, 0.5
      %v1641 = vmul.f32 %v1609, 0.5
      %v1642 = vmul.f32 %v1610, 0.5
      %v1643 = vmul.f32 %v1611, 0.5
      %v1644 = vadd.f32 %v1612, 0.5
      %v1645 = vadd.f32 %v1613, 0.5
      %v1646 = vadd.f32 %v1614, 0.5
      %v1647 = vadd.f32 %v1615, 0.5
      %v1648 = vadd.f32 %v1616, 0.5
      %v1649 = vadd.f32 %v1617, 0.5
      %v1650 = vadd.f32 %v1618, 0.5
      %v1651 = vadd.f32 %v1619, 0.5
      %v1652 = vadd.f32 %v1620, 0.5
      %v1653 = vadd.f32 %v1621, 0.5
      %v1654 = vadd.f32 %v1622, 0.5
      %v1655 = vadd.f32 %v1623, 0.5
      %v1656 = vadd.f32 %v1624, 0.5
      %v1657 = vadd.f32 %v1625, 0.5
      %v1658 = vadd.f32 %v1626, 0.5
      %v1659 = vadd.f32 %v1627, 0.5
      %v1660 = vadd.f32 %v1628, 0.5
      %v1661 = vadd.f32 %v1629, 0.5
      %v1662 = vadd.f32 %v1630, 0.5
      %v1663 = vadd.f32 %v1631, 0.5
      %v1664 = vadd.f32 %v1632, 0.5
      %v1665 = vadd.f32 %v1633, 0.5
      %v1666 = vadd.f32 %v1634, 0.5
      %v1667 = vadd.f32 %v1635, 0.5
      %v1668 = vadd.f32 %v1636, 0.5
      %v1669 = vadd.f32 %v1637, 0.5
      %v1670 = vadd.f32 %v1638, 0.5
      %v1671 = vadd.f32 %v1639, 0.5
      %v1672 = vadd.f32 %v1640, 0.5
      %v1673 = vadd.f32 %v1641, 0.5
      %v1674 = vadd.f32 %v1642, 0.5
      %v1675 = vadd.f32 %v1643, 0.5
      %1676 = vst [vmem:[%s262] sm:$0xff] %v1644
      %1677 = vst [vmem:[%s262 + $0x8] sm:$0xff] %v1645
      %1678 = vst [vmem:[%s262 + $0x10] sm:$0xff] %v1646
      %1679 = vst [vmem:[%s262 + $0x18] sm:$0xff] %v1647
      %1680 = vst [vmem:[%s262 + $0x20] sm:$0xff] %v1648
      %1681 = vst [vmem:[%s262 + $0x28] sm:$0xff] %v1649
      %1682 = vst [vmem:[%s262 + $0x30] sm:$0xff] %v1650
      %1683 = vst [vmem:[%s262 + $0x38] sm:$0xff] %v1651
      %1684 = vst [vmem:[%s262 + $0x40] sm:$0xff] %v1652
      %1685 = vst [vmem:[%s262 + $0x48] sm:$0xff] %v1653
      %1686 = vst [vmem:[%s262 + $0x50] sm:$0xff] %v1654
      %1687 = vst [vmem:[%s262 + $0x58] sm:$0xff] %v1655
      %1688 = vst [vmem:[%s262 + $0x60] sm:$0xff] %v1656
      %1689 = vst [vmem:[%s262 + $0x68] sm:$0xff] %v1657
      %1690 = vst [vmem:[%s262 + $0x70] sm:$0xff] %v1658
      %1691 = vst [vmem:[%s262 + $0x78] sm:$0xff] %v1659
      %1692 = vst [vmem:[%s262 + $0x80] sm:$0xff] %v1660
      %1693 = vst [vmem:[%s262 + $0x88] sm:$0xff] %v1661
      %1694 = vst [vmem:[%s262 + $0x90] sm:$0xff] %v1662
      %1695 = vst [vmem:[%s262 + $0x98] sm:$0xff] %v1663
      %1696 = vst [vmem:[%s262 + $0xa0] sm:$0xff] %v1664
      %1697 = vst [vmem:[%s262 + $0xa8] sm:$0xff] %v1665
      %1698 = vst [vmem:[%s262 + $0xb0] sm:$0xff] %v1666
      %1699 = vst [vmem:[%s262 + $0xb8] sm:$0xff] %v1667
      %1700 = vst [vmem:[%s262 + $0xc0] sm:$0xff] %v1668
      %1701 = vst [vmem:[%s262 + $0xc8] sm:$0xff] %v1669
      %1702 = vst [vmem:[%s262 + $0xd0] sm:$0xff] %v1670
      %1703 = vst [vmem:[%s262 + $0xd8] sm:$0xff] %v1671
      %1704 = vst [vmem:[%s262 + $0xe0] sm:$0xff] %v1672
      %1705 = vst [vmem:[%s262 + $0xe8] sm:$0xff] %v1673
      %1706 = vst [vmem:[%s262 + $0xf0] sm:$0xff] %v1674
      %1707 = vst [vmem:[%s262 + $0xf8] sm:$0xff] %v1675
      %s1708 = smul.u32 2, %s21
      %p1709 = scmp.lt.s32.totalorder %s20, 1
      %s1710 = scalar_select %p1709, %s20, 1
      %p1711 = scmp.lt.s32.totalorder %s1708, 1
      %s1712 = scalar_select %p1711, %s1708, 1
      %s1713 = smul.addr %s1710, 32
      %s1714 = sadd.s32 %s1712, %s1713
      %s1715 = smul.addr %s1714, 8
      %s1716 = scalar_lea.vmem %s5, %s1715
      // Predicated region
      $region41: #{interaction_forward.1} parent=39 // pred_check
        %p1717 = pneg %p160
      $region42: #{interaction_forward.1} parent=39 // pred_check_branch
        %1719 = sbr.rel (%p1717) target = $region44
      $region43: #{interaction_forward.1} parent=39 // pred_region
        %s1720 = smul.u32 2, %s21
      $region44: #{interaction_forward.1} parent=39 // pred_fallthru
        _
    $region40: #{interaction_forward.1} parent=5 // pred_fallthru
      _
    %p1721 = scmp.le.s32.totalorder 2, %s11
    // Predicated region
    $region45: #{interaction_forward.1} parent=5 // pred_check
      %p1722 = pneg %p1721
    $region46: #{interaction_forward.1} parent=5 // pred_check_branch
      %1724 = sbr.rel (%p1722) target = $region48
    $region47: #{interaction_forward.1} parent=5 // pred_region
      %s1725 = ssub.s32 %s11, 2
      // Predicated region
      $region49: #{interaction_forward.1} parent=47 // pred_check
        %p1726 = pneg %p166
      $region50: #{interaction_forward.1} parent=47 // pred_check_branch
        %1728 = sbr.rel (%p1726) target = $region52
      $region51: #{interaction_forward.1} parent=47 // pred_region
        %s1729 = smul.u32 2, %s23
        %p1730 = scmp.lt.s32.totalorder %s22, 1
        %s1731 = scalar_select %p1730, %s22, 1
        %p1732 = scmp.lt.s32.totalorder %s1729, 1
        %s1733 = scalar_select %p1732, %s1729, 1
        %s1734 = smul.addr %s1731, 32
        %s1735 = sadd.s32 %s1733, %s1734
        %s1736 = smul.addr %s1735, 8
        %s1737 = scalar_lea.vmem %s5, %s1736
      $region52: #{interaction_forward.1} parent=47 // pred_fallthru
        _
    $region48: #{interaction_forward.1} parent=5 // pred_fallthru
      _
  $region6: #{interaction_forward.1} parent=0 // loop_footer
    %s15 = sadd.s32 1, %s11
  $region7: #{interaction_forward.1} parent=0 // loop_footer_branch
    %10 = sbr.rel target = $region3
  $region8: #{interaction_forward.1} parent=0 // loop_exit
    _

</llo_original>
